<compile_context>
chip_gen: v7x
topology: tpu7x:2x2x1
jax: 0.10.0
libtpu: 0.0.40
codegen_flags: <defaults>
</compile_context>

<pallas_src>
import functools

import jax
import jax.numpy as jnp
from jax import lax
from jax.experimental import pallas as pl
from jax.experimental.pallas import tpu as pltpu


def _lstm_fused_kernel(x_ref,        # (T*Bp, I)    inputs, time-major flattened
                       h0_ref,       # (Bp, H)      initial hidden
                       c0_ref,       # (Bp, H)      initial cell
                       wih_t_ref,    # (I, 4H)      W_ih^T
                       whh_t_ref,    # (H, 4H)      W_hh^T
                       b_ref,        # (1, 4H)      b_ih + b_hh
                       wmlp_t_ref,   # (H, Op)      W_mlp^T (lane-padded)
                       bmlp_ref,     # (1, Op)      mlp bias (lane-padded)
                       out_ref,      # (T*Bp, Op)   sigmoid(mlp(h_t)) for all t
                       xproj_ref,    # VMEM (T*Bp, 4H) scratch: x @ W_ih^T + b
                       hall_ref,     # VMEM (T*Bp, H)  scratch: collected h_t
                       *, seq_len, batch_pad, hidden):
    T, B, H = seq_len, batch_pad, hidden

    # ---- Phase 1: batched, non-recurrent input projection (one MXU push,
    #      bias broadcast-added once, not per timestep). --------------------
    xproj_ref[...] = (
        jnp.dot(x_ref[...], wih_t_ref[...], preferred_element_type=jnp.float32)
        + b_ref[...]
    )

    # Hoist loop-invariant loads / constants out of the recurrence.
    whh = whh_t_ref[...]                                      # (H, 4H) resident
    lane = lax.broadcasted_iota(jnp.int32, (B, 4 * H), 1)
    g_mask = (lane >= 2 * H) & (lane < 3 * H)                 # cell-gate lanes

    h = h0_ref[...]
    c = c0_ref[...]

    # ---- Phase 2: recurrence. Only h @ W_hh is truly sequential. Batch is
    #      padded to a multiple of 8, so every static slice below is
    #      sublane-tile aligned. -------------------------------------------
    for t in range(T):
        gates = xproj_ref[t * B:(t + 1) * B, :] + jnp.dot(
            h, whh, preferred_element_type=jnp.float32)       # (B, 4H)

        # Dense EUP over the full 128-lane gate row, then lane-select the
        # tanh ("g") gate instead of slicing before the transcendentals.
        sig = jax.nn.sigmoid(gates)
        th = jnp.tanh(gates)
        act = jnp.where(g_mask, th, sig)                      # [i | f | g | o]

        i_g = act[:, 0 * H:1 * H]
        f_g = act[:, 1 * H:2 * H]
        g_g = act[:, 2 * H:3 * H]
        o_g = act[:, 3 * H:4 * H]

        c = f_g * c + i_g * g_g
        h = o_g * jnp.tanh(c)

        hall_ref[t * B:(t + 1) * B, :] = h                    # stage h_t

    # ---- Phase 3: one batched MLP + sigmoid over all timesteps, single
    #      lane-dense output store. -----------------------------------------
    y = jnp.dot(hall_ref[...], wmlp_t_ref[...],
                preferred_element_type=jnp.float32) + bmlp_ref[...]
    out_ref[...] = jax.nn.sigmoid(y).astype(out_ref.dtype)


def lstm_v2_forward(x, h0, c0, w_ih, w_hh, b_ih, b_hh, w_mlp, b_mlp):
    """x: (T, B, I); h0/c0: (B, H); returns (T, B, I-1)."""
    T, B, I = x.shape
    H = w_hh.shape[1]
    O = w_mlp.shape[0]
    assert O == I - 1

    # Sublane-align the batch and lane-align the MLP output (layout plumbing
    # only; padded rows/lanes are dropped in the wrapper).
    B_pad = ((B + 7) // 8) * 8
    O_pad = ((O + 127) // 128) * 128

    x_p = x if B_pad == B else jnp.pad(x, ((0, 0), (0, B_pad - B), (0, 0)))
    h0_p = h0 if B_pad == B else jnp.pad(h0, ((0, B_pad - B), (0, 0)))
    c0_p = c0 if B_pad == B else jnp.pad(c0, ((0, B_pad - B), (0, 0)))

    x2d = x_p.reshape(T * B_pad, I)               # time-major flatten
    wih_t = jnp.transpose(w_ih)                   # (I, 4H)
    whh_t = jnp.transpose(w_hh)                   # (H, 4H)
    b = (b_ih + b_hh).reshape(1, 4 * H)           # (1, 4H)
    wmlp_t = jnp.pad(jnp.transpose(w_mlp), ((0, 0), (0, O_pad - O)))  # (H, Op)
    bmlp = jnp.pad(b_mlp, ((0, O_pad - O),)).reshape(1, O_pad)        # (1, Op)

    kernel = functools.partial(
        _lstm_fused_kernel, seq_len=T, batch_pad=B_pad, hidden=H)

    grid_spec = pltpu.PrefetchScalarGridSpec(
        num_scalar_prefetch=0,
        grid=(1,),                                            # single invocation
        in_specs=[
            pl.BlockSpec((T * B_pad, I), lambda i: (0, 0)),   # x (flattened)
            pl.BlockSpec((B_pad, H), lambda i: (0, 0)),       # h0
            pl.BlockSpec((B_pad, H), lambda i: (0, 0)),       # c0
            pl.BlockSpec((I, 4 * H), lambda i: (0, 0)),       # W_ih^T
            pl.BlockSpec((H, 4 * H), lambda i: (0, 0)),       # W_hh^T
            pl.BlockSpec((1, 4 * H), lambda i: (0, 0)),       # bias
            pl.BlockSpec((H, O_pad), lambda i: (0, 0)),       # W_mlp^T
            pl.BlockSpec((1, O_pad), lambda i: (0, 0)),       # b_mlp
        ],
        out_specs=pl.BlockSpec((T * B_pad, O_pad), lambda i: (0, 0)),
        scratch_shapes=[
            pltpu.VMEM((T * B_pad, 4 * H), jnp.float32),      # x-projection
            pltpu.VMEM((T * B_pad, H), jnp.float32),          # collected h_t
        ],
    )

    out2d = pl.pallas_call(
        kernel,
        out_shape=jax.ShapeDtypeStruct((T * B_pad, O_pad), x.dtype),
        grid_spec=grid_spec,
        compiler_params=pltpu.CompilerParams(
            dimension_semantics=("arbitrary",),
        ),
    )(x2d, h0_p, c0_p, wih_t, whh_t, b, wmlp_t, bmlp)

    return out2d.reshape(T, B_pad, O_pad)[:, :B, :O]


def _xavier_normal(key, shape):
    # nn.init.xavier_normal: std = sqrt(2 / (fan_in + fan_out)), shape = (out, in)
    fan_out, fan_in = shape
    std = (2.0 / (fan_in + fan_out)) ** 0.5
    return std * jax.random.normal(key, shape, dtype=jnp.float32)


def _reference_forward(x, h0, c0, w_ih, w_hh, b_ih, b_hh, w_mlp, b_mlp):
    # Pure-JAX reference (matches PyTorch nn.LSTM gate order i, f, g, o).
    H = w_hh.shape[1]

    def step(carry, x_t):
        h, c = carry
        gates = x_t @ w_ih.T + b_ih + h @ w_hh.T + b_hh
        i = jax.nn.sigmoid(gates[:, 0 * H:1 * H])
        f = jax.nn.sigmoid(gates[:, 1 * H:2 * H])
        g = jnp.tanh(gates[:, 2 * H:3 * H])
        o = jax.nn.sigmoid(gates[:, 3 * H:4 * H])
        c = f * c + i * g
        h = o * jnp.tanh(c)
        y = jax.nn.sigmoid(h @ w_mlp.T + b_mlp)
        return (h, c), y

    _, ys = jax.lax.scan(step, (h0, c0), x)
    return ys


if __name__ == "__main__":
    # Small shapes consistent with the module: seq=8, batch=4, num_inputs=8, hidden=32.
    T, B, I, H = 8, 4, 8, 32
    O = I - 1

    key = jax.random.PRNGKey(0)
    k_x, k_wih, k_whh, k_wmlp, k_h0, k_c0 = jax.random.split(key, 6)

    x = jax.random.normal(k_x, (T, B, I), dtype=jnp.float32)

    # nn.LSTM params (single layer): weight_ih_l0 (4H, I), weight_hh_l0 (4H, H),
    # biases zero-initialized per init_weights; mlp Linear (I-1, H).
    w_ih = _xavier_normal(k_wih, (4 * H, I))
    w_hh = _xavier_normal(k_whh, (4 * H, H))
    b_ih = jnp.zeros((4 * H,), jnp.float32)
    b_hh = jnp.zeros((4 * H,), jnp.float32)
    w_mlp = _xavier_normal(k_wmlp, (O, H))
    b_mlp = jnp.zeros((O,), jnp.float32)

    # init_hidden: randn((num_layers=1, B, H)) for h0 and c0.
    # TODO(synk): module's init_hidden uses host-side torch.randn state; here the
    # initial hidden/cell are explicit kernel inputs.
    h0 = jax.random.normal(k_h0, (B, H), dtype=jnp.float32)
    c0 = jax.random.normal(k_c0, (B, H), dtype=jnp.float32)

    out = lstm_v2_forward(x, h0, c0, w_ih, w_hh, b_ih, b_hh, w_mlp, b_mlp)
    out = jax.block_until_ready(out)

    ref = _reference_forward(x, h0, c0, w_ih, w_hh, b_ih, b_hh, w_mlp, b_mlp)
    assert out.shape == (T, B, O)
    assert jnp.allclose(out, ref, atol=1e-5, rtol=1e-5), "mismatch vs reference"

    print("KERNEL_OK")
</pallas_src>

<mosaic_0001>
module attributes {stable_mosaic.version = 11 : i64} {
  func.func @_lstm_fused_kernel(%arg0: i32, %arg1: memref<64x8xf32, #tpu.memory_space<vmem>>, %arg2: memref<8x32xf32, #tpu.memory_space<vmem>>, %arg3: memref<8x32xf32, #tpu.memory_space<vmem>>, %arg4: memref<8x128xf32, #tpu.memory_space<vmem>>, %arg5: memref<32x128xf32, #tpu.memory_space<vmem>>, %arg6: memref<1x128xf32, #tpu.memory_space<vmem>>, %arg7: memref<32x128xf32, #tpu.memory_space<vmem>>, %arg8: memref<1x128xf32, #tpu.memory_space<vmem>>, %arg9: memref<64x128xf32, #tpu.memory_space<vmem>>, %arg10: memref<64x128xf32, #tpu.memory_space<vmem>>, %arg11: memref<64x32xf32, #tpu.memory_space<vmem>>) attributes {dimension_semantics = [#tpu.dimension_semantics<arbitrary>], iteration_bounds = array<i64: 1>, scalar_prefetch = 0 : i64, scratch_operands = 2 : i64, tpu.core_type = #tpu.core_type<tc>, window_params = [{pipeline_mode = #tpu.pipeline_mode<synchronous>, transform_indices = @transform_0, window_bounds = array<i64: 64, 8>}, {pipeline_mode = #tpu.pipeline_mode<synchronous>, transform_indices = @transform_1, window_bounds = array<i64: 8, 32>}, {pipeline_mode = #tpu.pipeline_mode<synchronous>, transform_indices = @transform_2, window_bounds = array<i64: 8, 32>}, {pipeline_mode = #tpu.pipeline_mode<synchronous>, transform_indices = @transform_3, window_bounds = array<i64: 8, 128>}, {pipeline_mode = #tpu.pipeline_mode<synchronous>, transform_indices = @transform_4, window_bounds = array<i64: 32, 128>}, {pipeline_mode = #tpu.pipeline_mode<synchronous>, transform_indices = @transform_5, window_bounds = array<i64: 1, 128>}, {pipeline_mode = #tpu.pipeline_mode<synchronous>, transform_indices = @transform_6, window_bounds = array<i64: 32, 128>}, {pipeline_mode = #tpu.pipeline_mode<synchronous>, transform_indices = @transform_7, window_bounds = array<i64: 1, 128>}, {pipeline_mode = #tpu.pipeline_mode<synchronous>, transform_indices = @transform_8, window_bounds = array<i64: 64, 128>}]} {
    %c0 = arith.constant 0 : index
    %c0_0 = arith.constant 0 : index
    %0 = vector.load %arg1[%c0, %c0_0] : memref<64x8xf32, #tpu.memory_space<vmem>>, vector<64x8xf32>
    %c0_1 = arith.constant 0 : index
    %c0_2 = arith.constant 0 : index
    %1 = vector.load %arg4[%c0_1, %c0_2] : memref<8x128xf32, #tpu.memory_space<vmem>>, vector<8x128xf32>
    %cst = arith.constant dense<0.000000e+00> : vector<64x128xf32>
    %2 = tpu.matmul %0, %1, %cst {dimension_numbers = #tpu.dot_dimension_numbers<[1], [0], [0], [1], [0, 0, 1, 1], [], []>} : vector<64x8xf32>, vector<8x128xf32>, vector<64x128xf32> -> vector<64x128xf32>
    %c0_3 = arith.constant 0 : index
    %c0_4 = arith.constant 0 : index
    %3 = vector.load %arg6[%c0_3, %c0_4] : memref<1x128xf32, #tpu.memory_space<vmem>>, vector<1x128xf32>
    %4 = vector.broadcast %3 : vector<1x128xf32> to vector<64x128xf32>
    %5 = arith.addf %2, %4 : vector<64x128xf32>
    %c0_5 = arith.constant 0 : index
    %c0_6 = arith.constant 0 : index
    %6 = vector.load %arg10[%c0_5, %c0_6] : memref<64x128xf32, #tpu.memory_space<vmem>>, vector<64x128xf32>
    tpu.vector_store %arg10[%c0_5, %c0_6], %5 {strides = array<i32>} : memref<64x128xf32, #tpu.memory_space<vmem>>, vector<64x128xf32>,
    %c0_7 = arith.constant 0 : index
    %c0_8 = arith.constant 0 : index
    %7 = vector.load %arg5[%c0_7, %c0_8] : memref<32x128xf32, #tpu.memory_space<vmem>>, vector<32x128xf32>
    %8 = tpu.iota {dimensions = array<i32: 1>} : vector<8x128xi32>
    %c64_i32 = arith.constant 64 : i32
    %9 = vector.broadcast %c64_i32 : i32 to vector<8x128xi32>
    %10 = arith.cmpi sge, %8, %9 : vector<8x128xi32>
    %c96_i32 = arith.constant 96 : i32
    %11 = vector.broadcast %c96_i32 : i32 to vector<8x128xi32>
    %12 = arith.cmpi slt, %8, %11 : vector<8x128xi32>
    %13 = arith.andi %10, %12 : vector<8x128xi1>
    %c0_9 = arith.constant 0 : index
    %c0_10 = arith.constant 0 : index
    %14 = vector.load %arg2[%c0_9, %c0_10] : memref<8x32xf32, #tpu.memory_space<vmem>>, vector<8x32xf32>
    %c0_11 = arith.constant 0 : index
    %c0_12 = arith.constant 0 : index
    %15 = vector.load %arg3[%c0_11, %c0_12] : memref<8x32xf32, #tpu.memory_space<vmem>>, vector<8x32xf32>
    %c0_13 = arith.constant 0 : index
    %c0_14 = arith.constant 0 : index
    %16 = vector.load %arg10[%c0_13, %c0_14] : memref<64x128xf32, #tpu.memory_space<vmem>>, vector<8x128xf32>
    %cst_15 = arith.constant dense<0.000000e+00> : vector<8x128xf32>
    %17 = tpu.matmul %14, %7, %cst_15 {dimension_numbers = #tpu.dot_dimension_numbers<[1], [0], [0], [1], [0, 0, 1, 1], [], []>} : vector<8x32xf32>, vector<32x128xf32>, vector<8x128xf32> -> vector<8x128xf32>
    %18 = arith.addf %16, %17 : vector<8x128xf32>
    %19 = arith.negf %18 : vector<8x128xf32>
    %20 = math.exp %19 : vector<8x128xf32>
    %cst_16 = arith.constant 1.000000e+00 : f32
    %21 = vector.broadcast %cst_16 : f32 to vector<8x128xf32>
    %22 = arith.addf %21, %20 : vector<8x128xf32>
    %23 = arith.divf %21, %22 : vector<8x128xf32>
    %24 = math.tanh %18 : vector<8x128xf32>
    %25 = arith.select %13, %24, %23 : vector<8x128xi1>, vector<8x128xf32>
    %26 = vector.extract_strided_slice %25 {offsets = [0, 0], sizes = [8, 32], strides = [1, 1]} : vector<8x128xf32> to vector<8x32xf32>
    %27 = vector.extract_strided_slice %25 {offsets = [0, 32], sizes = [8, 32], strides = [1, 1]} : vector<8x128xf32> to vector<8x32xf32>
    %28 = vector.extract_strided_slice %25 {offsets = [0, 64], sizes = [8, 32], strides = [1, 1]} : vector<8x128xf32> to vector<8x32xf32>
    %29 = vector.extract_strided_slice %25 {offsets = [0, 96], sizes = [8, 32], strides = [1, 1]} : vector<8x128xf32> to vector<8x32xf32>
    %30 = arith.mulf %27, %15 : vector<8x32xf32>
    %31 = arith.mulf %26, %28 : vector<8x32xf32>
    %32 = arith.addf %30, %31 : vector<8x32xf32>
    %33 = math.tanh %32 : vector<8x32xf32>
    %34 = arith.mulf %29, %33 : vector<8x32xf32>
    %c0_17 = arith.constant 0 : index
    %c0_18 = arith.constant 0 : index
    %35 = vector.load %arg11[%c0_17, %c0_18] : memref<64x32xf32, #tpu.memory_space<vmem>>, vector<8x32xf32>
    tpu.vector_store %arg11[%c0_17, %c0_18], %34 {strides = array<i32>} : memref<64x32xf32, #tpu.memory_space<vmem>>, vector<8x32xf32>,
    %c8 = arith.constant 8 : index
    %c0_19 = arith.constant 0 : index
    %36 = vector.load %arg10[%c8, %c0_19] : memref<64x128xf32, #tpu.memory_space<vmem>>, vector<8x128xf32>
    %cst_20 = arith.constant dense<0.000000e+00> : vector<8x128xf32>
    %37 = tpu.matmul %34, %7, %cst_20 {dimension_numbers = #tpu.dot_dimension_numbers<[1], [0], [0], [1], [0, 0, 1, 1], [], []>} : vector<8x32xf32>, vector<32x128xf32>, vector<8x128xf32> -> vector<8x128xf32>
    %38 = arith.addf %36, %37 : vector<8x128xf32>
    %39 = arith.negf %38 : vector<8x128xf32>
    %40 = math.exp %39 : vector<8x128xf32>
    %cst_21 = arith.constant 1.000000e+00 : f32
    %41 = vector.broadcast %cst_21 : f32 to vector<8x128xf32>
    %42 = arith.addf %41, %40 : vector<8x128xf32>
    %43 = arith.divf %41, %42 : vector<8x128xf32>
    %44 = math.tanh %38 : vector<8x128xf32>
    %45 = arith.select %13, %44, %43 : vector<8x128xi1>, vector<8x128xf32>
    %46 = vector.extract_strided_slice %45 {offsets = [0, 0], sizes = [8, 32], strides = [1, 1]} : vector<8x128xf32> to vector<8x32xf32>
    %47 = vector.extract_strided_slice %45 {offsets = [0, 32], sizes = [8, 32], strides = [1, 1]} : vector<8x128xf32> to vector<8x32xf32>
    %48 = vector.extract_strided_slice %45 {offsets = [0, 64], sizes = [8, 32], strides = [1, 1]} : vector<8x128xf32> to vector<8x32xf32>
    %49 = vector.extract_strided_slice %45 {offsets = [0, 96], sizes = [8, 32], strides = [1, 1]} : vector<8x128xf32> to vector<8x32xf32>
    %50 = arith.mulf %47, %32 : vector<8x32xf32>
    %51 = arith.mulf %46, %48 : vector<8x32xf32>
    %52 = arith.addf %50, %51 : vector<8x32xf32>
    %53 = math.tanh %52 : vector<8x32xf32>
    %54 = arith.mulf %49, %53 : vector<8x32xf32>
    %c8_22 = arith.constant 8 : index
    %c0_23 = arith.constant 0 : index
    %55 = vector.load %arg11[%c8_22, %c0_23] : memref<64x32xf32, #tpu.memory_space<vmem>>, vector<8x32xf32>
    tpu.vector_store %arg11[%c8_22, %c0_23], %54 {strides = array<i32>} : memref<64x32xf32, #tpu.memory_space<vmem>>, vector<8x32xf32>,
    %c16 = arith.constant 16 : index
    %c0_24 = arith.constant 0 : index
    %56 = vector.load %arg10[%c16, %c0_24] : memref<64x128xf32, #tpu.memory_space<vmem>>, vector<8x128xf32>
    %cst_25 = arith.constant dense<0.000000e+00> : vector<8x128xf32>
    %57 = tpu.matmul %54, %7, %cst_25 {dimension_numbers = #tpu.dot_dimension_numbers<[1], [0], [0], [1], [0, 0, 1, 1], [], []>} : vector<8x32xf32>, vector<32x128xf32>, vector<8x128xf32> -> vector<8x128xf32>
    %58 = arith.addf %56, %57 : vector<8x128xf32>
    %59 = arith.negf %58 : vector<8x128xf32>
    %60 = math.exp %59 : vector<8x128xf32>
    %cst_26 = arith.constant 1.000000e+00 : f32
    %61 = vector.broadcast %cst_26 : f32 to vector<8x128xf32>
    %62 = arith.addf %61, %60 : vector<8x128xf32>
    %63 = arith.divf %61, %62 : vector<8x128xf32>
    %64 = math.tanh %58 : vector<8x128xf32>
    %65 = arith.select %13, %64, %63 : vector<8x128xi1>, vector<8x128xf32>
    %66 = vector.extract_strided_slice %65 {offsets = [0, 0], sizes = [8, 32], strides = [1, 1]} : vector<8x128xf32> to vector<8x32xf32>
    %67 = vector.extract_strided_slice %65 {offsets = [0, 32], sizes = [8, 32], strides = [1, 1]} : vector<8x128xf32> to vector<8x32xf32>
    %68 = vector.extract_strided_slice %65 {offsets = [0, 64], sizes = [8, 32], strides = [1, 1]} : vector<8x128xf32> to vector<8x32xf32>
    %69 = vector.extract_strided_slice %65 {offsets = [0, 96], sizes = [8, 32], strides = [1, 1]} : vector<8x128xf32> to vector<8x32xf32>
    %70 = arith.mulf %67, %52 : vector<8x32xf32>
    %71 = arith.mulf %66, %68 : vector<8x32xf32>
    %72 = arith.addf %70, %71 : vector<8x32xf32>
    %73 = math.tanh %72 : vector<8x32xf32>
    %74 = arith.mulf %69, %73 : vector<8x32xf32>
    %c16_27 = arith.constant 16 : index
    %c0_28 = arith.constant 0 : index
    %75 = vector.load %arg11[%c16_27, %c0_28] : memref<64x32xf32, #tpu.memory_space<vmem>>, vector<8x32xf32>
    tpu.vector_store %arg11[%c16_27, %c0_28], %74 {strides = array<i32>} : memref<64x32xf32, #tpu.memory_space<vmem>>, vector<8x32xf32>,
    %c24 = arith.constant 24 : index
    %c0_29 = arith.constant 0 : index
    %76 = vector.load %arg10[%c24, %c0_29] : memref<64x128xf32, #tpu.memory_space<vmem>>, vector<8x128xf32>
    %cst_30 = arith.constant dense<0.000000e+00> : vector<8x128xf32>
    %77 = tpu.matmul %74, %7, %cst_30 {dimension_numbers = #tpu.dot_dimension_numbers<[1], [0], [0], [1], [0, 0, 1, 1], [], []>} : vector<8x32xf32>, vector<32x128xf32>, vector<8x128xf32> -> vector<8x128xf32>
    %78 = arith.addf %76, %77 : vector<8x128xf32>
    %79 = arith.negf %78 : vector<8x128xf32>
    %80 = math.exp %79 : vector<8x128xf32>
    %cst_31 = arith.constant 1.000000e+00 : f32
    %81 = vector.broadcast %cst_31 : f32 to vector<8x128xf32>
    %82 = arith.addf %81, %80 : vector<8x128xf32>
    %83 = arith.divf %81, %82 : vector<8x128xf32>
    %84 = math.tanh %78 : vector<8x128xf32>
    %85 = arith.select %13, %84, %83 : vector<8x128xi1>, vector<8x128xf32>
    %86 = vector.extract_strided_slice %85 {offsets = [0, 0], sizes = [8, 32], strides = [1, 1]} : vector<8x128xf32> to vector<8x32xf32>
    %87 = vector.extract_strided_slice %85 {offsets = [0, 32], sizes = [8, 32], strides = [1, 1]} : vector<8x128xf32> to vector<8x32xf32>
    %88 = vector.extract_strided_slice %85 {offsets = [0, 64], sizes = [8, 32], strides = [1, 1]} : vector<8x128xf32> to vector<8x32xf32>
    %89 = vector.extract_strided_slice %85 {offsets = [0, 96], sizes = [8, 32], strides = [1, 1]} : vector<8x128xf32> to vector<8x32xf32>
    %90 = arith.mulf %87, %72 : vector<8x32xf32>
    %91 = arith.mulf %86, %88 : vector<8x32xf32>
    %92 = arith.addf %90, %91 : vector<8x32xf32>
    %93 = math.tanh %92 : vector<8x32xf32>
    %94 = arith.mulf %89, %93 : vector<8x32xf32>
    %c24_32 = arith.constant 24 : index
    %c0_33 = arith.constant 0 : index
    %95 = vector.load %arg11[%c24_32, %c0_33] : memref<64x32xf32, #tpu.memory_space<vmem>>, vector<8x32xf32>
    tpu.vector_store %arg11[%c24_32, %c0_33], %94 {strides = array<i32>} : memref<64x32xf32, #tpu.memory_space<vmem>>, vector<8x32xf32>,
    %c32 = arith.constant 32 : index
    %c0_34 = arith.constant 0 : index
    %96 = vector.load %arg10[%c32, %c0_34] : memref<64x128xf32, #tpu.memory_space<vmem>>, vector<8x128xf32>
    %cst_35 = arith.constant dense<0.000000e+00> : vector<8x128xf32>
    %97 = tpu.matmul %94, %7, %cst_35 {dimension_numbers = #tpu.dot_dimension_numbers<[1], [0], [0], [1], [0, 0, 1, 1], [], []>} : vector<8x32xf32>, vector<32x128xf32>, vector<8x128xf32> -> vector<8x128xf32>
    %98 = arith.addf %96, %97 : vector<8x128xf32>
    %99 = arith.negf %98 : vector<8x128xf32>
    %100 = math.exp %99 : vector<8x128xf32>
    %cst_36 = arith.constant 1.000000e+00 : f32
    %101 = vector.broadcast %cst_36 : f32 to vector<8x128xf32>
    %102 = arith.addf %101, %100 : vector<8x128xf32>
    %103 = arith.divf %101, %102 : vector<8x128xf32>
    %104 = math.tanh %98 : vector<8x128xf32>
    %105 = arith.select %13, %104, %103 : vector<8x128xi1>, vector<8x128xf32>
    %106 = vector.extract_strided_slice %105 {offsets = [0, 0], sizes = [8, 32], strides = [1, 1]} : vector<8x128xf32> to vector<8x32xf32>
    %107 = vector.extract_strided_slice %105 {offsets = [0, 32], sizes = [8, 32], strides = [1, 1]} : vector<8x128xf32> to vector<8x32xf32>
    %108 = vector.extract_strided_slice %105 {offsets = [0, 64], sizes = [8, 32], strides = [1, 1]} : vector<8x128xf32> to vector<8x32xf32>
    %109 = vector.extract_strided_slice %105 {offsets = [0, 96], sizes = [8, 32], strides = [1, 1]} : vector<8x128xf32> to vector<8x32xf32>
    %110 = arith.mulf %107, %92 : vector<8x32xf32>
    %111 = arith.mulf %106, %108 : vector<8x32xf32>
    %112 = arith.addf %110, %111 : vector<8x32xf32>
    %113 = math.tanh %112 : vector<8x32xf32>
    %114 = arith.mulf %109, %113 : vector<8x32xf32>
    %c32_37 = arith.constant 32 : index
    %c0_38 = arith.constant 0 : index
    %115 = vector.load %arg11[%c32_37, %c0_38] : memref<64x32xf32, #tpu.memory_space<vmem>>, vector<8x32xf32>
    tpu.vector_store %arg11[%c32_37, %c0_38], %114 {strides = array<i32>} : memref<64x32xf32, #tpu.memory_space<vmem>>, vector<8x32xf32>,
    %c40 = arith.constant 40 : index
    %c0_39 = arith.constant 0 : index
    %116 = vector.load %arg10[%c40, %c0_39] : memref<64x128xf32, #tpu.memory_space<vmem>>, vector<8x128xf32>
    %cst_40 = arith.constant dense<0.000000e+00> : vector<8x128xf32>
    %117 = tpu.matmul %114, %7, %cst_40 {dimension_numbers = #tpu.dot_dimension_numbers<[1], [0], [0], [1], [0, 0, 1, 1], [], []>} : vector<8x32xf32>, vector<32x128xf32>, vector<8x128xf32> -> vector<8x128xf32>
    %118 = arith.addf %116, %117 : vector<8x128xf32>
    %119 = arith.negf %118 : vector<8x128xf32>
    %120 = math.exp %119 : vector<8x128xf32>
    %cst_41 = arith.constant 1.000000e+00 : f32
    %121 = vector.broadcast %cst_41 : f32 to vector<8x128xf32>
    %122 = arith.addf %121, %120 : vector<8x128xf32>
    %123 = arith.divf %121, %122 : vector<8x128xf32>
    %124 = math.tanh %118 : vector<8x128xf32>
    %125 = arith.select %13, %124, %123 : vector<8x128xi1>, vector<8x128xf32>
    %126 = vector.extract_strided_slice %125 {offsets = [0, 0], sizes = [8, 32], strides = [1, 1]} : vector<8x128xf32> to vector<8x32xf32>
    %127 = vector.extract_strided_slice %125 {offsets = [0, 32], sizes = [8, 32], strides = [1, 1]} : vector<8x128xf32> to vector<8x32xf32>
    %128 = vector.extract_strided_slice %125 {offsets = [0, 64], sizes = [8, 32], strides = [1, 1]} : vector<8x128xf32> to vector<8x32xf32>
    %129 = vector.extract_strided_slice %125 {offsets = [0, 96], sizes = [8, 32], strides = [1, 1]} : vector<8x128xf32> to vector<8x32xf32>
    %130 = arith.mulf %127, %112 : vector<8x32xf32>
    %131 = arith.mulf %126, %128 : vector<8x32xf32>
    %132 = arith.addf %130, %131 : vector<8x32xf32>
    %133 = math.tanh %132 : vector<8x32xf32>
    %134 = arith.mulf %129, %133 : vector<8x32xf32>
    %c40_42 = arith.constant 40 : index
    %c0_43 = arith.constant 0 : index
    %135 = vector.load %arg11[%c40_42, %c0_43] : memref<64x32xf32, #tpu.memory_space<vmem>>, vector<8x32xf32>
    tpu.vector_store %arg11[%c40_42, %c0_43], %134 {strides = array<i32>} : memref<64x32xf32, #tpu.memory_space<vmem>>, vector<8x32xf32>,
    %c48 = arith.constant 48 : index
    %c0_44 = arith.constant 0 : index
    %136 = vector.load %arg10[%c48, %c0_44] : memref<64x128xf32, #tpu.memory_space<vmem>>, vector<8x128xf32>
    %cst_45 = arith.constant dense<0.000000e+00> : vector<8x128xf32>
    %137 = tpu.matmul %134, %7, %cst_45 {dimension_numbers = #tpu.dot_dimension_numbers<[1], [0], [0], [1], [0, 0, 1, 1], [], []>} : vector<8x32xf32>, vector<32x128xf32>, vector<8x128xf32> -> vector<8x128xf32>
    %138 = arith.addf %136, %137 : vector<8x128xf32>
    %139 = arith.negf %138 : vector<8x128xf32>
    %140 = math.exp %139 : vector<8x128xf32>
    %cst_46 = arith.constant 1.000000e+00 : f32
    %141 = vector.broadcast %cst_46 : f32 to vector<8x128xf32>
    %142 = arith.addf %141, %140 : vector<8x128xf32>
    %143 = arith.divf %141, %142 : vector<8x128xf32>
    %144 = math.tanh %138 : vector<8x128xf32>
    %145 = arith.select %13, %144, %143 : vector<8x128xi1>, vector<8x128xf32>
    %146 = vector.extract_strided_slice %145 {offsets = [0, 0], sizes = [8, 32], strides = [1, 1]} : vector<8x128xf32> to vector<8x32xf32>
    %147 = vector.extract_strided_slice %145 {offsets = [0, 32], sizes = [8, 32], strides = [1, 1]} : vector<8x128xf32> to vector<8x32xf32>
    %148 = vector.extract_strided_slice %145 {offsets = [0, 64], sizes = [8, 32], strides = [1, 1]} : vector<8x128xf32> to vector<8x32xf32>
    %149 = vector.extract_strided_slice %145 {offsets = [0, 96], sizes = [8, 32], strides = [1, 1]} : vector<8x128xf32> to vector<8x32xf32>
    %150 = arith.mulf %147, %132 : vector<8x32xf32>
    %151 = arith.mulf %146, %148 : vector<8x32xf32>
    %152 = arith.addf %150, %151 : vector<8x32xf32>
    %153 = math.tanh %152 : vector<8x32xf32>
    %154 = arith.mulf %149, %153 : vector<8x32xf32>
    %c48_47 = arith.constant 48 : index
    %c0_48 = arith.constant 0 : index
    %155 = vector.load %arg11[%c48_47, %c0_48] : memref<64x32xf32, #tpu.memory_space<vmem>>, vector<8x32xf32>
    tpu.vector_store %arg11[%c48_47, %c0_48], %154 {strides = array<i32>} : memref<64x32xf32, #tpu.memory_space<vmem>>, vector<8x32xf32>,
    %c56 = arith.constant 56 : index
    %c0_49 = arith.constant 0 : index
    %156 = vector.load %arg10[%c56, %c0_49] : memref<64x128xf32, #tpu.memory_space<vmem>>, vector<8x128xf32>
    %cst_50 = arith.constant dense<0.000000e+00> : vector<8x128xf32>
    %157 = tpu.matmul %154, %7, %cst_50 {dimension_numbers = #tpu.dot_dimension_numbers<[1], [0], [0], [1], [0, 0, 1, 1], [], []>} : vector<8x32xf32>, vector<32x128xf32>, vector<8x128xf32> -> vector<8x128xf32>
    %158 = arith.addf %156, %157 : vector<8x128xf32>
    %159 = arith.negf %158 : vector<8x128xf32>
    %160 = math.exp %159 : vector<8x128xf32>
    %cst_51 = arith.constant 1.000000e+00 : f32
    %161 = vector.broadcast %cst_51 : f32 to vector<8x128xf32>
    %162 = arith.addf %161, %160 : vector<8x128xf32>
    %163 = arith.divf %161, %162 : vector<8x128xf32>
    %164 = math.tanh %158 : vector<8x128xf32>
    %165 = arith.select %13, %164, %163 : vector<8x128xi1>, vector<8x128xf32>
    %166 = vector.extract_strided_slice %165 {offsets = [0, 0], sizes = [8, 32], strides = [1, 1]} : vector<8x128xf32> to vector<8x32xf32>
    %167 = vector.extract_strided_slice %165 {offsets = [0, 32], sizes = [8, 32], strides = [1, 1]} : vector<8x128xf32> to vector<8x32xf32>
    %168 = vector.extract_strided_slice %165 {offsets = [0, 64], sizes = [8, 32], strides = [1, 1]} : vector<8x128xf32> to vector<8x32xf32>
    %169 = vector.extract_strided_slice %165 {offsets = [0, 96], sizes = [8, 32], strides = [1, 1]} : vector<8x128xf32> to vector<8x32xf32>
    %170 = arith.mulf %167, %152 : vector<8x32xf32>
    %171 = arith.mulf %166, %168 : vector<8x32xf32>
    %172 = arith.addf %170, %171 : vector<8x32xf32>
    %173 = math.tanh %172 : vector<8x32xf32>
    %174 = arith.mulf %169, %173 : vector<8x32xf32>
    %c56_52 = arith.constant 56 : index
    %c0_53 = arith.constant 0 : index
    %175 = vector.load %arg11[%c56_52, %c0_53] : memref<64x32xf32, #tpu.memory_space<vmem>>, vector<8x32xf32>
    tpu.vector_store %arg11[%c56_52, %c0_53], %174 {strides = array<i32>} : memref<64x32xf32, #tpu.memory_space<vmem>>, vector<8x32xf32>,
    %c0_54 = arith.constant 0 : index
    %c0_55 = arith.constant 0 : index
    %176 = vector.load %arg11[%c0_54, %c0_55] : memref<64x32xf32, #tpu.memory_space<vmem>>, vector<64x32xf32>
    %c0_56 = arith.constant 0 : index
    %c0_57 = arith.constant 0 : index
    %177 = vector.load %arg7[%c0_56, %c0_57] : memref<32x128xf32, #tpu.memory_space<vmem>>, vector<32x128xf32>
    %cst_58 = arith.constant dense<0.000000e+00> : vector<64x128xf32>
    %178 = tpu.matmul %176, %177, %cst_58 {dimension_numbers = #tpu.dot_dimension_numbers<[1], [0], [0], [1], [0, 0, 1, 1], [], []>} : vector<64x32xf32>, vector<32x128xf32>, vector<64x128xf32> -> vector<64x128xf32>
    %c0_59 = arith.constant 0 : index
    %c0_60 = arith.constant 0 : index
    %179 = vector.load %arg8[%c0_59, %c0_60] : memref<1x128xf32, #tpu.memory_space<vmem>>, vector<1x128xf32>
    %180 = vector.broadcast %179 : vector<1x128xf32> to vector<64x128xf32>
    %181 = arith.addf %178, %180 : vector<64x128xf32>
    %182 = arith.negf %181 : vector<64x128xf32>
    %183 = math.exp %182 : vector<64x128xf32>
    %cst_61 = arith.constant 1.000000e+00 : f32
    %184 = vector.broadcast %cst_61 : f32 to vector<64x128xf32>
    %185 = arith.addf %184, %183 : vector<64x128xf32>
    %186 = arith.divf %184, %185 : vector<64x128xf32>
    %c0_62 = arith.constant 0 : index
    %c0_63 = arith.constant 0 : index
    %187 = vector.load %arg9[%c0_62, %c0_63] : memref<64x128xf32, #tpu.memory_space<vmem>>, vector<64x128xf32>
    tpu.vector_store %arg9[%c0_62, %c0_63], %186 {strides = array<i32>} : memref<64x128xf32, #tpu.memory_space<vmem>>, vector<64x128xf32>,
    return
  }
  func.func @transform_0(%arg0: i32) -> (i32, i32) {
    %c0_i32 = arith.constant 0 : i32
    %c0_i32_0 = arith.constant 0 : i32
    %c0_i32_1 = arith.constant 0 : i32
    return %c0_i32, %c0_i32_0 : i32, i32
  }
  func.func @transform_1(%arg0: i32) -> (i32, i32) {
    %c0_i32 = arith.constant 0 : i32
    %c0_i32_0 = arith.constant 0 : i32
    %c0_i32_1 = arith.constant 0 : i32
    return %c0_i32, %c0_i32_0 : i32, i32
  }
  func.func @transform_2(%arg0: i32) -> (i32, i32) {
    %c0_i32 = arith.constant 0 : i32
    %c0_i32_0 = arith.constant 0 : i32
    %c0_i32_1 = arith.constant 0 : i32
    return %c0_i32, %c0_i32_0 : i32, i32
  }
  func.func @transform_3(%arg0: i32) -> (i32, i32) {
    %c0_i32 = arith.constant 0 : i32
    %c0_i32_0 = arith.constant 0 : i32
    %c0_i32_1 = arith.constant 0 : i32
    return %c0_i32, %c0_i32_0 : i32, i32
  }
  func.func @transform_4(%arg0: i32) -> (i32, i32) {
    %c0_i32 = arith.constant 0 : i32
    %c0_i32_0 = arith.constant 0 : i32
    %c0_i32_1 = arith.constant 0 : i32
    return %c0_i32, %c0_i32_0 : i32, i32
  }
  func.func @transform_5(%arg0: i32) -> (i32, i32) {
    %c0_i32 = arith.constant 0 : i32
    %c0_i32_0 = arith.constant 0 : i32
    %c0_i32_1 = arith.constant 0 : i32
    return %c0_i32, %c0_i32_0 : i32, i32
  }
  func.func @transform_6(%arg0: i32) -> (i32, i32) {
    %c0_i32 = arith.constant 0 : i32
    %c0_i32_0 = arith.constant 0 : i32
    %c0_i32_1 = arith.constant 0 : i32
    return %c0_i32, %c0_i32_0 : i32, i32
  }
  func.func @transform_7(%arg0: i32) -> (i32, i32) {
    %c0_i32 = arith.constant 0 : i32
    %c0_i32_0 = arith.constant 0 : i32
    %c0_i32_1 = arith.constant 0 : i32
    return %c0_i32, %c0_i32_0 : i32, i32
  }
  func.func @transform_8(%arg0: i32) -> (i32, i32) {
    %c0_i32 = arith.constant 0 : i32
    %c0_i32_0 = arith.constant 0 : i32
    %c0_i32_1 = arith.constant 0 : i32
    return %c0_i32, %c0_i32_0 : i32, i32
  }
}

</mosaic_0001>

<llo_original>
// kernel: tpu_custom_call.1
$region0: #{tpu_custom_call.1}
  #allocation0 [shape = 'u32[]', space=smem, size = 0x4, offset = 0x4, fixed_abs, tag = 'smem constant byte address 0x4 - core index']
  #allocation1 [shape = 'u32[144,128]{1,0:T(1,128)}', space=vmem, size = 0x12000, scoped, tag = 'internal scratch']
  #allocation2 [shape = 'f32[64,128]{1,0:T(8,128)}', space=vmem, size = 0x8000, scoped, tag = 'scratch operand']
  #allocation3 [shape = 'f32[64,32]{1,0:T(8,128)}', space=vmem, size = 0x8000, scoped, tag = 'scratch operand']
  %s0 = inlined_call_operand.vmem [shape: f32[64,8], index: 0, kind: input, shape index: {}]
  %s1 = inlined_call_operand.vmem [shape: f32[8,32], index: 1, kind: input, shape index: {}]
  %s2 = inlined_call_operand.hbm [shape: f32[8,32], index: 2, kind: input, shape index: {}]
  %s3 = inlined_call_operand.vmem [shape: f32[8,128], index: 3, kind: input, shape index: {}]
  %s4 = inlined_call_operand.vmem [shape: f32[32,128], index: 4, kind: input, shape index: {}]
  %s5 = inlined_call_operand.vmem [shape: f32[1,128], index: 5, kind: input, shape index: {}]
  %s6 = inlined_call_operand.vmem [shape: f32[32,128], index: 6, kind: input, shape index: {}]
  %s7 = inlined_call_operand.vmem [shape: f32[1,128], index: 7, kind: input, shape index: {}]
  %s8 = inlined_call_operand.hbm [shape: f32[64,128], index: 8, kind: output, shape index: {}]
  %s9 = sld [smem:[#allocation0]]
  $region46: #{tpu_custom_call.1} parent=0
    _
  %s11 = ssub.s32 1, %s9
  %s12 = scalar_select 0, %s11, %s9
  $region1: #{tpu_custom_call.1} parent=0
    #allocation4 [shape = 'u8[4096]{0}', space=vmem, size = 0x1000, scoped, tag = 'input window, operand 2, single buffered']
    #allocation5 [shape = 's32[1]{0}', space=sflag, size = 0x4, scoped, tag = 'scoped memory for tpu_custom_call.1']
    #allocation6 [shape = 's32[1]{0}', space=sflag, size = 0x4, scoped, tag = 'scoped memory for tpu_custom_call.1']
    #allocation7 [shape = 'u8[32768]{0}', space=vmem, size = 0x8000, scoped, tag = 'output window, operand 0, single buffered']
    %13 = vsyncpa [#allocation5], 0
    %14 = vsyncpa [#allocation6], 0
    // Predicated region
    $region2: #{tpu_custom_call.1} parent=1 // pred_check
      _
    $region3: #{tpu_custom_call.1} parent=1 // pred_check_branch
      %16 = sbr.rel (0) target = $region5
    $region4: #{tpu_custom_call.1} parent=1 // pred_region
      _
    $region5: #{tpu_custom_call.1} parent=1 // pred_fallthru
      _
    // Predicated region
    $region6: #{tpu_custom_call.1} parent=1 // pred_check
      _
    $region7: #{tpu_custom_call.1} parent=1 // pred_check_branch
      %18 = sbr.rel (0) target = $region9
    $region8: #{tpu_custom_call.1} parent=1 // pred_region
      _
    $region9: #{tpu_custom_call.1} parent=1 // pred_fallthru
      _
    // Predicated region
    $region10: #{tpu_custom_call.1} parent=1 // pred_check
      _
    $region11: #{tpu_custom_call.1} parent=1 // pred_check_branch
      %20 = sbr.rel (0) target = $region13
    $region12: #{tpu_custom_call.1} parent=1 // pred_region
      %s22 = ssub.s32 128, 128
      %23 = vsyncadd [#allocation5], %s22
      %s25 = sshll.u32 [#allocation4], 4
      %s26 = int_to_ptr.vmem [resolvable:$true] %s25
      %28 = dma.hbm_to_vmem [thread:$0]  %s2, 128, %s26, [#allocation5]
    $region13: #{tpu_custom_call.1} parent=1 // pred_fallthru
      _
    // Predicated region
    $region14: #{tpu_custom_call.1} parent=1 // pred_check
      _
    $region15: #{tpu_custom_call.1} parent=1 // pred_check_branch
      %30 = sbr.rel (0) target = $region17
    $region16: #{tpu_custom_call.1} parent=1 // pred_region
      _
    $region17: #{tpu_custom_call.1} parent=1 // pred_fallthru
      _
    // Predicated region
    $region18: #{tpu_custom_call.1} parent=1 // pred_check
      _
    $region19: #{tpu_custom_call.1} parent=1 // pred_check_branch
      %32 = sbr.rel (0) target = $region21
    $region20: #{tpu_custom_call.1} parent=1 // pred_region
      _
    $region21: #{tpu_custom_call.1} parent=1 // pred_fallthru
      _
    // Predicated region
    $region22: #{tpu_custom_call.1} parent=1 // pred_check
      _
    $region23: #{tpu_custom_call.1} parent=1 // pred_check_branch
      %34 = sbr.rel (0) target = $region25
    $region24: #{tpu_custom_call.1} parent=1 // pred_region
      _
    $region25: #{tpu_custom_call.1} parent=1 // pred_fallthru
      _
    // Predicated region
    $region26: #{tpu_custom_call.1} parent=1 // pred_check
      _
    $region27: #{tpu_custom_call.1} parent=1 // pred_check_branch
      %36 = sbr.rel (0) target = $region29
    $region28: #{tpu_custom_call.1} parent=1 // pred_region
      _
    $region29: #{tpu_custom_call.1} parent=1 // pred_fallthru
      _
    // Predicated region
    $region30: #{tpu_custom_call.1} parent=1 // pred_check
      _
    $region31: #{tpu_custom_call.1} parent=1 // pred_check_branch
      %38 = sbr.rel (0) target = $region33
    $region32: #{tpu_custom_call.1} parent=1 // pred_region
      _
    $region33: #{tpu_custom_call.1} parent=1 // pred_fallthru
      _
    // Predicated region
    $region34: #{tpu_custom_call.1} parent=1 // pred_check
      _
    $region35: #{tpu_custom_call.1} parent=1 // pred_check_branch
      %40 = sbr.rel (0) target = $region37
    $region36: #{tpu_custom_call.1} parent=1 // pred_region
      %41 = dma.done [#allocation5], 128
    $region37: #{tpu_custom_call.1} parent=1 // pred_fallthru
      _
    %v42 = vld [vmem:[%s0] sm:$0xff]
    %v43 = vld [vmem:[%s0 + $0x8] sm:$0xff]
    %v44 = vld [vmem:[%s0 + $0x10] sm:$0xff]
    %v45 = vld [vmem:[%s0 + $0x18] sm:$0xff]
    %v46 = vld [vmem:[%s0 + $0x20] sm:$0xff]
    %v47 = vld [vmem:[%s0 + $0x28] sm:$0xff]
    %v48 = vld [vmem:[%s0 + $0x30] sm:$0xff]
    %v49 = vld [vmem:[%s0 + $0x38] sm:$0xff]
    %v50 = vld [vmem:[%s3] sm:$0xff]
    %v51 = vld [vmem:[%s5] sm:$0x1]
    %v53 = vlaneseq
    %v54 = vshrl.u32 %v53, 7
    %v55 = vsub.s32 0, %v54
    %v56 = vrot.slane %v51, %v55
    %vm58 = vcmask 64512
    %v60 = vsel %vm58, %v42, 0
    %v63 = vsel %vm58, %v43, 0
    %v66 = vsel %vm58, %v44, 0
    %v69 = vsel %vm58, %v45, 0
    %v72 = vsel %vm58, %v46, 0
    %v75 = vsel %vm58, %v47, 0
    %v78 = vsel %vm58, %v48, 0
    %v81 = vsel %vm58, %v49, 0
    %83 = vmatprep.subr.mxu0 0.0
    %84 = vmatpush1.msra.mxu0 %v50
    %85 = vmatprep.subr.mxu0 0.0
    %86 = vmatpush1.msra.mxu0 0.0
    %87 = vmatprep.subr.mxu0 0.0
    %88 = vmatpush1.msra.mxu0 0.0
    %89 = vmatprep.subr.mxu0 0.0
    %90 = vmatpush1.msra.mxu0 0.0
    %91 = vmatprep.subr.mxu0 0.0
    %92 = vmatpush1.msra.mxu0 0.0
    %93 = vmatprep.subr.mxu0 0.0
    %94 = vmatpush1.msra.mxu0 0.0
    %95 = vmatprep.subr.mxu0 0.0
    %96 = vmatpush1.msra.mxu0 0.0
    %97 = vmatprep.subr.mxu0 0.0
    %98 = vmatpush1.msra.mxu0 0.0
    %99 = vmatprep.subr.mxu0 0.0
    %100 = vmatpush1.msra.mxu0 0.0
    %101 = vmatprep.subr.mxu0 0.0
    %102 = vmatpush1.msra.mxu0 0.0
    %103 = vmatprep.subr.mxu0 0.0
    %104 = vmatpush1.msra.mxu0 0.0
    %105 = vmatprep.subr.mxu0 0.0
    %106 = vmatpush1.msra.mxu0 0.0
    %107 = vmatprep.subr.mxu0 0.0
    %108 = vmatpush1.msra.mxu0 0.0
    %109 = vmatprep.subr.mxu0 0.0
    %110 = vmatpush1.msra.mxu0 0.0
    %111 = vmatprep.subr.mxu0 0.0
    %112 = vmatpush1.msra.mxu0 0.0
    %113 = vmatprep.subr.mxu0 0.0
    %114 = vmatpush1.msra.mxu0 0.0
    %115 = vmatprep.subr.mxu0 0.0
    %116 = vmatpush1.msra.mxu0 0.0
    %117 = vmatprep.subr.mxu0 0.0
    %118 = vmatpush1.msra.mxu0 0.0
    %119 = vmatprep.subr.mxu0 0.0
    %120 = vmatpush1.msra.mxu0 0.0
    %121 = vmatprep.subr.mxu0 0.0
    %122 = vmatpush1.msra.mxu0 0.0
    %123 = vmatprep.subr.mxu0 0.0
    %124 = vmatpush1.msra.mxu0 0.0
    %125 = vmatprep.subr.mxu0 0.0
    %126 = vmatpush1.msra.mxu0 0.0
    %127 = vmatprep.subr.mxu0 0.0
    %128 = vmatpush1.msra.mxu0 0.0
    %129 = vmatprep.subr.mxu0 0.0
    %130 = vmatpush1.msra.mxu0 0.0
    %131 = vmatprep.subr.mxu0 0.0
    %132 = vmatpush1.msra.mxu0 0.0
    %133 = vmatprep.subr.mxu0 0.0
    %134 = vmatpush1.msra.mxu0 0.0
    %135 = vmatprep.subr.mxu0 0.0
    %136 = vmatpush1.msra.mxu0 0.0
    %137 = vmatprep.subr.mxu0 0.0
    %138 = vmatpush1.msra.mxu0 0.0
    %139 = vmatprep.subr.mxu0 0.0
    %140 = vmatpush1.msra.mxu0 0.0
    %141 = vmatprep.subr.mxu0 0.0
    %142 = vmatpush1.msra.mxu0 0.0
    %143 = vmatprep.subr.mxu0 0.0
    %144 = vmatpush1.msra.mxu0 0.0
    %145 = vmatprep.subr.mxu0 0.0
    %146 = vmatpush1.msra.mxu0 0.0
    %147 = vmatprep.mubr.f32.mxu0 0.0
    %148 = vmatmul.mubr.f32.gmra.mrb[0].mxu0 %v60
    %v149 = vpop.f32.mrb[0].mxu0
    %v150 = vadd.f32 %v56, %v149
    %v151 = vpop.f32.mrb[0].mxu0
    %152 = vmatprep.mubr.f32.mxu0 0.0
    %153 = vmatmul.mubr.f32.gmra.mrb[0].mxu0 %v63
    %v154 = vpop.f32.mrb[0].mxu0
    %v155 = vadd.f32 %v56, %v154
    %v156 = vpop.f32.mrb[0].mxu0
    %157 = vmatprep.mubr.f32.mxu0 0.0
    %158 = vmatmul.mubr.f32.gmra.mrb[0].mxu0 %v66
    %v159 = vpop.f32.mrb[0].mxu0
    %v160 = vadd.f32 %v56, %v159
    %v161 = vpop.f32.mrb[0].mxu0
    %162 = vmatprep.mubr.f32.mxu0 0.0
    %163 = vmatmul.mubr.f32.gmra.mrb[0].mxu0 %v69
    %v164 = vpop.f32.mrb[0].mxu0
    %v165 = vadd.f32 %v56, %v164
    %v166 = vpop.f32.mrb[0].mxu0
    %167 = vmatprep.mubr.f32.mxu0 0.0
    %168 = vmatmul.mubr.f32.gmra.mrb[0].mxu0 %v72
    %v169 = vpop.f32.mrb[0].mxu0
    %v170 = vadd.f32 %v56, %v169
    %v171 = vpop.f32.mrb[0].mxu0
    %172 = vmatprep.mubr.f32.mxu0 0.0
    %173 = vmatmul.mubr.f32.gmra.mrb[0].mxu0 %v75
    %v174 = vpop.f32.mrb[0].mxu0
    %v175 = vadd.f32 %v56, %v174
    %v176 = vpop.f32.mrb[0].mxu0
    %177 = vmatprep.mubr.f32.mxu0 0.0
    %178 = vmatmul.mubr.f32.gmra.mrb[0].mxu0 %v78
    %v179 = vpop.f32.mrb[0].mxu0
    %v180 = vadd.f32 %v56, %v179
    %v181 = vpop.f32.mrb[0].mxu0
    %182 = vmatprep.mubr.f32.mxu0 0.0
    %183 = vmatmul.mubr.f32.gmra.mrb[0].mxu0 %v81
    %v184 = vpop.f32.mrb[0].mxu0
    %v185 = vadd.f32 %v56, %v184
    %v186 = vpop.f32.mrb[0].mxu0
    %187 = vdwg.mxu0
    %188 = vst [vmem:[#allocation2] sm:$0xff] %v150
    %189 = vst [vmem:[#allocation2 + $0x8] sm:$0xff] %v155
    %190 = vst [vmem:[#allocation2 + $0x10] sm:$0xff] %v160
    %191 = vst [vmem:[#allocation2 + $0x18] sm:$0xff] %v165
    %192 = vst [vmem:[#allocation2 + $0x20] sm:$0xff] %v170
    %193 = vst [vmem:[#allocation2 + $0x28] sm:$0xff] %v175
    %194 = vst [vmem:[#allocation2 + $0x30] sm:$0xff] %v180
    %195 = vst [vmem:[#allocation2 + $0x38] sm:$0xff] %v185
    %v196 = vld [vmem:[%s4] sm:$0xff]
    %v197 = vld [vmem:[%s4 + $0x8] sm:$0xff]
    %v198 = vld [vmem:[%s4 + $0x10] sm:$0xff]
    %v199 = vld [vmem:[%s4 + $0x18] sm:$0xff]
    %v200 = vlaneseq
    %v201 = vand.u32 %v200, 127
    %vm202 = vcmp.ge.s32.totalorder %v201, 64
    %vm203 = vcmp.lt.s32.totalorder %v201, 96
    %vm204 = vmand %vm202, %vm203
    %v205 = vld [vmem:[%s1] sm:$0xff]
    %v206 = vld [vmem:[#allocation4] sm:$0xff]
    %v207 = vld [vmem:[#allocation2] sm:$0xff]
    %vm208 = vcmask 261120
    %v210 = vsel %vm208, %v205, 0
    %212 = vmatprep.subr.mxu0 0.0
    %213 = vmatpush1.msra.mxu0 %v196
    %214 = vmatprep.subr.mxu0 0.0
    %215 = vmatpush1.msra.mxu0 %v197
    %216 = vmatprep.subr.mxu0 0.0
    %217 = vmatpush1.msra.mxu0 %v198
    %218 = vmatprep.subr.mxu0 0.0
    %219 = vmatpush1.msra.mxu0 %v199
    %220 = vmatprep.subr.mxu0 0.0
    %221 = vmatpush1.msra.mxu0 0.0
    %222 = vmatprep.subr.mxu0 0.0
    %223 = vmatpush1.msra.mxu0 0.0
    %224 = vmatprep.subr.mxu0 0.0
    %225 = vmatpush1.msra.mxu0 0.0
    %226 = vmatprep.subr.mxu0 0.0
    %227 = vmatpush1.msra.mxu0 0.0
    %228 = vmatprep.subr.mxu0 0.0
    %229 = vmatpush1.msra.mxu0 0.0
    %230 = vmatprep.subr.mxu0 0.0
    %231 = vmatpush1.msra.mxu0 0.0
    %232 = vmatprep.subr.mxu0 0.0
    %233 = vmatpush1.msra.mxu0 0.0
    %234 = vmatprep.subr.mxu0 0.0
    %235 = vmatpush1.msra.mxu0 0.0
    %236 = vmatprep.subr.mxu0 0.0
    %237 = vmatpush1.msra.mxu0 0.0
    %238 = vmatprep.subr.mxu0 0.0
    %239 = vmatpush1.msra.mxu0 0.0
    %240 = vmatprep.subr.mxu0 0.0
    %241 = vmatpush1.msra.mxu0 0.0
    %242 = vmatprep.subr.mxu0 0.0
    %243 = vmatpush1.msra.mxu0 0.0
    %244 = vmatprep.subr.mxu0 0.0
    %245 = vmatpush1.msra.mxu0 0.0
    %246 = vmatprep.subr.mxu0 0.0
    %247 = vmatpush1.msra.mxu0 0.0
    %248 = vmatprep.subr.mxu0 0.0
    %249 = vmatpush1.msra.mxu0 0.0
    %250 = vmatprep.subr.mxu0 0.0
    %251 = vmatpush1.msra.mxu0 0.0
    %252 = vmatprep.subr.mxu0 0.0
    %253 = vmatpush1.msra.mxu0 0.0
    %254 = vmatprep.subr.mxu0 0.0
    %255 = vmatpush1.msra.mxu0 0.0
    %256 = vmatprep.subr.mxu0 0.0
    %257 = vmatpush1.msra.mxu0 0.0
    %258 = vmatprep.subr.mxu0 0.0
    %259 = vmatpush1.msra.mxu0 0.0
    %260 = vmatprep.subr.mxu0 0.0
    %261 = vmatpush1.msra.mxu0 0.0
    %262 = vmatprep.subr.mxu0 0.0
    %263 = vmatpush1.msra.mxu0 0.0
    %264 = vmatprep.subr.mxu0 0.0
    %265 = vmatpush1.msra.mxu0 0.0
    %266 = vmatprep.subr.mxu0 0.0
    %267 = vmatpush1.msra.mxu0 0.0
    %268 = vmatprep.subr.mxu0 0.0
    %269 = vmatpush1.msra.mxu0 0.0
    %270 = vmatprep.subr.mxu0 0.0
    %271 = vmatpush1.msra.mxu0 0.0
    %272 = vmatprep.subr.mxu0 0.0
    %273 = vmatpush1.msra.mxu0 0.0
    %274 = vmatprep.subr.mxu0 0.0
    %275 = vmatpush1.msra.mxu0 0.0
    %276 = vmatprep.mubr.f32.mxu0 0.0
    %277 = vmatmul.mubr.f32.gmra.mrb[0].mxu0 %v210
    %v278 = vpop.f32.mrb[0].mxu0
    %v279 = vadd.f32 0.0, %v278
    %v280 = vpop.f32.mrb[0].mxu0
    %281 = vdwg.mxu0
    %v282 = vadd.f32 %v207, %v279
    %v283 = vxor.u32 %v282, 2147483648
    %v284 = vmul.f32 %v283, 1.442695
    %v285 = vpow.pop %v284
    %v286 = vadd.f32 %v285, 1.0
    %v287 = vrcp.pop %v286
    %v288 = vmul.f32 1.0, %v287
    %v289 = vtanh.pop %v282
    %v290 = vsel %vm204, %v289, %v288
    %292 = vrot.lane.b32.xlu0 %v206, 32
    %v293 = vpop.permute.xlu0 %292
    %v295 = vmul.f32 %v290, %v293
    %297 = vrot.lane.b32.xlu0 %v290, 64
    %v298 = vpop.permute.xlu0 %297
    %v300 = vmul.f32 %v290, %v298
    %302 = vrot.lane.b32.xlu0 %v300, 32
    %v303 = vpop.permute.xlu0 %302
    %v305 = vadd.f32 %v295, %v303
    %v306 = vtanh.pop %v305
    %308 = vrot.lane.b32.xlu0 %v306, 64
    %v309 = vpop.permute.xlu0 %308
    %v311 = vmul.f32 %v290, %v309
    %313 = vrot.lane.b32.xlu0 %v311, 32
    %v314 = vpop.permute.xlu0 %313
    %316 = vst.msk [vmem:[#allocation3] sm:$0xff] %vm208, %v314
    %v317 = vld [vmem:[#allocation2 + $0x8] sm:$0xff]
    %v318 = vsel %vm208, %v314, 0
    %320 = vmatprep.subr.mxu0 0.0
    %321 = vmatpush1.msra.mxu0 %v196
    %322 = vmatprep.subr.mxu0 0.0
    %323 = vmatpush1.msra.mxu0 %v197
    %324 = vmatprep.subr.mxu0 0.0
    %325 = vmatpush1.msra.mxu0 %v198
    %326 = vmatprep.subr.mxu0 0.0
    %327 = vmatpush1.msra.mxu0 %v199
    %328 = vmatprep.subr.mxu0 0.0
    %329 = vmatpush1.msra.mxu0 0.0
    %330 = vmatprep.subr.mxu0 0.0
    %331 = vmatpush1.msra.mxu0 0.0
    %332 = vmatprep.subr.mxu0 0.0
    %333 = vmatpush1.msra.mxu0 0.0
    %334 = vmatprep.subr.mxu0 0.0
    %335 = vmatpush1.msra.mxu0 0.0
    %336 = vmatprep.subr.mxu0 0.0
    %337 = vmatpush1.msra.mxu0 0.0
    %338 = vmatprep.subr.mxu0 0.0
    %339 = vmatpush1.msra.mxu0 0.0
    %340 = vmatprep.subr.mxu0 0.0
    %341 = vmatpush1.msra.mxu0 0.0
    %342 = vmatprep.subr.mxu0 0.0
    %343 = vmatpush1.msra.mxu0 0.0
    %344 = vmatprep.subr.mxu0 0.0
    %345 = vmatpush1.msra.mxu0 0.0
    %346 = vmatprep.subr.mxu0 0.0
    %347 = vmatpush1.msra.mxu0 0.0
    %348 = vmatprep.subr.mxu0 0.0
    %349 = vmatpush1.msra.mxu0 0.0
    %350 = vmatprep.subr.mxu0 0.0
    %351 = vmatpush1.msra.mxu0 0.0
    %352 = vmatprep.subr.mxu0 0.0
    %353 = vmatpush1.msra.mxu0 0.0
    %354 = vmatprep.subr.mxu0 0.0
    %355 = vmatpush1.msra.mxu0 0.0
    %356 = vmatprep.subr.mxu0 0.0
    %357 = vmatpush1.msra.mxu0 0.0
    %358 = vmatprep.subr.mxu0 0.0
    %359 = vmatpush1.msra.mxu0 0.0
    %360 = vmatprep.subr.mxu0 0.0
    %361 = vmatpush1.msra.mxu0 0.0
    %362 = vmatprep.subr.mxu0 0.0
    %363 = vmatpush1.msra.mxu0 0.0
    %364 = vmatprep.subr.mxu0 0.0
    %365 = vmatpush1.msra.mxu0 0.0
    %366 = vmatprep.subr.mxu0 0.0
    %367 = vmatpush1.msra.mxu0 0.0
    %368 = vmatprep.subr.mxu0 0.0
    %369 = vmatpush1.msra.mxu0 0.0
    %370 = vmatprep.subr.mxu0 0.0
    %371 = vmatpush1.msra.mxu0 0.0
    %372 = vmatprep.subr.mxu0 0.0
    %373 = vmatpush1.msra.mxu0 0.0
    %374 = vmatprep.subr.mxu0 0.0
    %375 = vmatpush1.msra.mxu0 0.0
    %376 = vmatprep.subr.mxu0 0.0
    %377 = vmatpush1.msra.mxu0 0.0
    %378 = vmatprep.subr.mxu0 0.0
    %379 = vmatpush1.msra.mxu0 0.0
    %380 = vmatprep.subr.mxu0 0.0
    %381 = vmatpush1.msra.mxu0 0.0
    %382 = vmatprep.subr.mxu0 0.0
    %383 = vmatpush1.msra.mxu0 0.0
    %384 = vmatprep.mubr.f32.mxu0 0.0
    %385 = vmatmul.mubr.f32.gmra.mrb[0].mxu0 %v318
    %v386 = vpop.f32.mrb[0].mxu0
    %v387 = vadd.f32 0.0, %v386
    %v388 = vpop.f32.mrb[0].mxu0
    %389 = vdwg.mxu0
    %v390 = vadd.f32 %v317, %v387
    %v391 = vxor.u32 %v390, 2147483648
    %v392 = vmul.f32 %v391, 1.442695
    %v393 = vpow.pop %v392
    %v394 = vadd.f32 %v393, 1.0
    %v395 = vrcp.pop %v394
    %v396 = vmul.f32 1.0, %v395
    %v397 = vtanh.pop %v390
    %v398 = vsel %vm204, %v397, %v396
    %v399 = vmul.f32 %v398, %v305
    %401 = vrot.lane.b32.xlu0 %v398, 64
    %v402 = vpop.permute.xlu0 %401
    %v404 = vmul.f32 %v398, %v402
    %406 = vrot.lane.b32.xlu0 %v404, 32
    %v407 = vpop.permute.xlu0 %406
    %v409 = vadd.f32 %v399, %v407
    %v410 = vtanh.pop %v409
    %412 = vrot.lane.b32.xlu0 %v410, 64
    %v413 = vpop.permute.xlu0 %412
    %v415 = vmul.f32 %v398, %v413
    %417 = vrot.lane.b32.xlu0 %v415, 32
    %v418 = vpop.permute.xlu0 %417
    %420 = vst.msk [vmem:[#allocation3 + $0x8] sm:$0xff] %vm208, %v418
    %v421 = vld [vmem:[#allocation2 + $0x10] sm:$0xff]
    %v422 = vsel %vm208, %v418, 0
    %424 = vmatprep.subr.mxu0 0.0
    %425 = vmatpush1.msra.mxu0 %v196
    %426 = vmatprep.subr.mxu0 0.0
    %427 = vmatpush1.msra.mxu0 %v197
    %428 = vmatprep.subr.mxu0 0.0
    %429 = vmatpush1.msra.mxu0 %v198
    %430 = vmatprep.subr.mxu0 0.0
    %431 = vmatpush1.msra.mxu0 %v199
    %432 = vmatprep.subr.mxu0 0.0
    %433 = vmatpush1.msra.mxu0 0.0
    %434 = vmatprep.subr.mxu0 0.0
    %435 = vmatpush1.msra.mxu0 0.0
    %436 = vmatprep.subr.mxu0 0.0
    %437 = vmatpush1.msra.mxu0 0.0
    %438 = vmatprep.subr.mxu0 0.0
    %439 = vmatpush1.msra.mxu0 0.0
    %440 = vmatprep.subr.mxu0 0.0
    %441 = vmatpush1.msra.mxu0 0.0
    %442 = vmatprep.subr.mxu0 0.0
    %443 = vmatpush1.msra.mxu0 0.0
    %444 = vmatprep.subr.mxu0 0.0
    %445 = vmatpush1.msra.mxu0 0.0
    %446 = vmatprep.subr.mxu0 0.0
    %447 = vmatpush1.msra.mxu0 0.0
    %448 = vmatprep.subr.mxu0 0.0
    %449 = vmatpush1.msra.mxu0 0.0
    %450 = vmatprep.subr.mxu0 0.0
    %451 = vmatpush1.msra.mxu0 0.0
    %452 = vmatprep.subr.mxu0 0.0
    %453 = vmatpush1.msra.mxu0 0.0
    %454 = vmatprep.subr.mxu0 0.0
    %455 = vmatpush1.msra.mxu0 0.0
    %456 = vmatprep.subr.mxu0 0.0
    %457 = vmatpush1.msra.mxu0 0.0
    %458 = vmatprep.subr.mxu0 0.0
    %459 = vmatpush1.msra.mxu0 0.0
    %460 = vmatprep.subr.mxu0 0.0
    %461 = vmatpush1.msra.mxu0 0.0
    %462 = vmatprep.subr.mxu0 0.0
    %463 = vmatpush1.msra.mxu0 0.0
    %464 = vmatprep.subr.mxu0 0.0
    %465 = vmatpush1.msra.mxu0 0.0
    %466 = vmatprep.subr.mxu0 0.0
    %467 = vmatpush1.msra.mxu0 0.0
    %468 = vmatprep.subr.mxu0 0.0
    %469 = vmatpush1.msra.mxu0 0.0
    %470 = vmatprep.subr.mxu0 0.0
    %471 = vmatpush1.msra.mxu0 0.0
    %472 = vmatprep.subr.mxu0 0.0
    %473 = vmatpush1.msra.mxu0 0.0
    %474 = vmatprep.subr.mxu0 0.0
    %475 = vmatpush1.msra.mxu0 0.0
    %476 = vmatprep.subr.mxu0 0.0
    %477 = vmatpush1.msra.mxu0 0.0
    %478 = vmatprep.subr.mxu0 0.0
    %479 = vmatpush1.msra.mxu0 0.0
    %480 = vmatprep.subr.mxu0 0.0
    %481 = vmatpush1.msra.mxu0 0.0
    %482 = vmatprep.subr.mxu0 0.0
    %483 = vmatpush1.msra.mxu0 0.0
    %484 = vmatprep.subr.mxu0 0.0
    %485 = vmatpush1.msra.mxu0 0.0
    %486 = vmatprep.subr.mxu0 0.0
    %487 = vmatpush1.msra.mxu0 0.0
    %488 = vmatprep.mubr.f32.mxu0 0.0
    %489 = vmatmul.mubr.f32.gmra.mrb[0].mxu0 %v422
    %v490 = vpop.f32.mrb[0].mxu0
    %v491 = vadd.f32 0.0, %v490
    %v492 = vpop.f32.mrb[0].mxu0
    %493 = vdwg.mxu0
    %v494 = vadd.f32 %v421, %v491
    %v495 = vxor.u32 %v494, 2147483648
    %v496 = vmul.f32 %v495, 1.442695
    %v497 = vpow.pop %v496
    %v498 = vadd.f32 %v497, 1.0
    %v499 = vrcp.pop %v498
    %v500 = vmul.f32 1.0, %v499
    %v501 = vtanh.pop %v494
    %v502 = vsel %vm204, %v501, %v500
    %v503 = vmul.f32 %v502, %v409
    %505 = vrot.lane.b32.xlu0 %v502, 64
    %v506 = vpop.permute.xlu0 %505
    %v508 = vmul.f32 %v502, %v506
    %510 = vrot.lane.b32.xlu0 %v508, 32
    %v511 = vpop.permute.xlu0 %510
    %v513 = vadd.f32 %v503, %v511
    %v514 = vtanh.pop %v513
    %516 = vrot.lane.b32.xlu0 %v514, 64
    %v517 = vpop.permute.xlu0 %516
    %v519 = vmul.f32 %v502, %v517
    %521 = vrot.lane.b32.xlu0 %v519, 32
    %v522 = vpop.permute.xlu0 %521
    %524 = vst.msk [vmem:[#allocation3 + $0x10] sm:$0xff] %vm208, %v522
    %v525 = vld [vmem:[#allocation2 + $0x18] sm:$0xff]
    %v526 = vsel %vm208, %v522, 0
    %528 = vmatprep.subr.mxu0 0.0
    %529 = vmatpush1.msra.mxu0 %v196
    %530 = vmatprep.subr.mxu0 0.0
    %531 = vmatpush1.msra.mxu0 %v197
    %532 = vmatprep.subr.mxu0 0.0
    %533 = vmatpush1.msra.mxu0 %v198
    %534 = vmatprep.subr.mxu0 0.0
    %535 = vmatpush1.msra.mxu0 %v199
    %536 = vmatprep.subr.mxu0 0.0
    %537 = vmatpush1.msra.mxu0 0.0
    %538 = vmatprep.subr.mxu0 0.0
    %539 = vmatpush1.msra.mxu0 0.0
    %540 = vmatprep.subr.mxu0 0.0
    %541 = vmatpush1.msra.mxu0 0.0
    %542 = vmatprep.subr.mxu0 0.0
    %543 = vmatpush1.msra.mxu0 0.0
    %544 = vmatprep.subr.mxu0 0.0
    %545 = vmatpush1.msra.mxu0 0.0
    %546 = vmatprep.subr.mxu0 0.0
    %547 = vmatpush1.msra.mxu0 0.0
    %548 = vmatprep.subr.mxu0 0.0
    %549 = vmatpush1.msra.mxu0 0.0
    %550 = vmatprep.subr.mxu0 0.0
    %551 = vmatpush1.msra.mxu0 0.0
    %552 = vmatprep.subr.mxu0 0.0
    %553 = vmatpush1.msra.mxu0 0.0
    %554 = vmatprep.subr.mxu0 0.0
    %555 = vmatpush1.msra.mxu0 0.0
    %556 = vmatprep.subr.mxu0 0.0
    %557 = vmatpush1.msra.mxu0 0.0
    %558 = vmatprep.subr.mxu0 0.0
    %559 = vmatpush1.msra.mxu0 0.0
    %560 = vmatprep.subr.mxu0 0.0
    %561 = vmatpush1.msra.mxu0 0.0
    %562 = vmatprep.subr.mxu0 0.0
    %563 = vmatpush1.msra.mxu0 0.0
    %564 = vmatprep.subr.mxu0 0.0
    %565 = vmatpush1.msra.mxu0 0.0
    %566 = vmatprep.subr.mxu0 0.0
    %567 = vmatpush1.msra.mxu0 0.0
    %568 = vmatprep.subr.mxu0 0.0
    %569 = vmatpush1.msra.mxu0 0.0
    %570 = vmatprep.subr.mxu0 0.0
    %571 = vmatpush1.msra.mxu0 0.0
    %572 = vmatprep.subr.mxu0 0.0
    %573 = vmatpush1.msra.mxu0 0.0
    %574 = vmatprep.subr.mxu0 0.0
    %575 = vmatpush1.msra.mxu0 0.0
    %576 = vmatprep.subr.mxu0 0.0
    %577 = vmatpush1.msra.mxu0 0.0
    %578 = vmatprep.subr.mxu0 0.0
    %579 = vmatpush1.msra.mxu0 0.0
    %580 = vmatprep.subr.mxu0 0.0
    %581 = vmatpush1.msra.mxu0 0.0
    %582 = vmatprep.subr.mxu0 0.0
    %583 = vmatpush1.msra.mxu0 0.0
    %584 = vmatprep.subr.mxu0 0.0
    %585 = vmatpush1.msra.mxu0 0.0
    %586 = vmatprep.subr.mxu0 0.0
    %587 = vmatpush1.msra.mxu0 0.0
    %588 = vmatprep.subr.mxu0 0.0
    %589 = vmatpush1.msra.mxu0 0.0
    %590 = vmatprep.subr.mxu0 0.0
    %591 = vmatpush1.msra.mxu0 0.0
    %592 = vmatprep.mubr.f32.mxu0 0.0
    %593 = vmatmul.mubr.f32.gmra.mrb[0].mxu0 %v526
    %v594 = vpop.f32.mrb[0].mxu0
    %v595 = vadd.f32 0.0, %v594
    %v596 = vpop.f32.mrb[0].mxu0
    %597 = vdwg.mxu0
    %v598 = vadd.f32 %v525, %v595
    %v599 = vxor.u32 %v598, 2147483648
    %v600 = vmul.f32 %v599, 1.442695
    %v601 = vpow.pop %v600
    %v602 = vadd.f32 %v601, 1.0
    %v603 = vrcp.pop %v602
    %v604 = vmul.f32 1.0, %v603
    %v605 = vtanh.pop %v598
    %v606 = vsel %vm204, %v605, %v604
    %v607 = vmul.f32 %v606, %v513
    %609 = vrot.lane.b32.xlu0 %v606, 64
    %v610 = vpop.permute.xlu0 %609
    %v612 = vmul.f32 %v606, %v610
    %614 = vrot.lane.b32.xlu0 %v612, 32
    %v615 = vpop.permute.xlu0 %614
    %v617 = vadd.f32 %v607, %v615
    %v618 = vtanh.pop %v617
    %620 = vrot.lane.b32.xlu0 %v618, 64
    %v621 = vpop.permute.xlu0 %620
    %v623 = vmul.f32 %v606, %v621
    %625 = vrot.lane.b32.xlu0 %v623, 32
    %v626 = vpop.permute.xlu0 %625
    %628 = vst.msk [vmem:[#allocation3 + $0x18] sm:$0xff] %vm208, %v626
    %v629 = vld [vmem:[#allocation2 + $0x20] sm:$0xff]
    %v630 = vsel %vm208, %v626, 0
    %632 = vmatprep.subr.mxu0 0.0
    %633 = vmatpush1.msra.mxu0 %v196
    %634 = vmatprep.subr.mxu0 0.0
    %635 = vmatpush1.msra.mxu0 %v197
    %636 = vmatprep.subr.mxu0 0.0
    %637 = vmatpush1.msra.mxu0 %v198
    %638 = vmatprep.subr.mxu0 0.0
    %639 = vmatpush1.msra.mxu0 %v199
    %640 = vmatprep.subr.mxu0 0.0
    %641 = vmatpush1.msra.mxu0 0.0
    %642 = vmatprep.subr.mxu0 0.0
    %643 = vmatpush1.msra.mxu0 0.0
    %644 = vmatprep.subr.mxu0 0.0
    %645 = vmatpush1.msra.mxu0 0.0
    %646 = vmatprep.subr.mxu0 0.0
    %647 = vmatpush1.msra.mxu0 0.0
    %648 = vmatprep.subr.mxu0 0.0
    %649 = vmatpush1.msra.mxu0 0.0
    %650 = vmatprep.subr.mxu0 0.0
    %651 = vmatpush1.msra.mxu0 0.0
    %652 = vmatprep.subr.mxu0 0.0
    %653 = vmatpush1.msra.mxu0 0.0
    %654 = vmatprep.subr.mxu0 0.0
    %655 = vmatpush1.msra.mxu0 0.0
    %656 = vmatprep.subr.mxu0 0.0
    %657 = vmatpush1.msra.mxu0 0.0
    %658 = vmatprep.subr.mxu0 0.0
    %659 = vmatpush1.msra.mxu0 0.0
    %660 = vmatprep.subr.mxu0 0.0
    %661 = vmatpush1.msra.mxu0 0.0
    %662 = vmatprep.subr.mxu0 0.0
    %663 = vmatpush1.msra.mxu0 0.0
    %664 = vmatprep.subr.mxu0 0.0
    %665 = vmatpush1.msra.mxu0 0.0
    %666 = vmatprep.subr.mxu0 0.0
    %667 = vmatpush1.msra.mxu0 0.0
    %668 = vmatprep.subr.mxu0 0.0
    %669 = vmatpush1.msra.mxu0 0.0
    %670 = vmatprep.subr.mxu0 0.0
    %671 = vmatpush1.msra.mxu0 0.0
    %672 = vmatprep.subr.mxu0 0.0
    %673 = vmatpush1.msra.mxu0 0.0
    %674 = vmatprep.subr.mxu0 0.0
    %675 = vmatpush1.msra.mxu0 0.0
    %676 = vmatprep.subr.mxu0 0.0
    %677 = vmatpush1.msra.mxu0 0.0
    %678 = vmatprep.subr.mxu0 0.0
    %679 = vmatpush1.msra.mxu0 0.0
    %680 = vmatprep.subr.mxu0 0.0
    %681 = vmatpush1.msra.mxu0 0.0
    %682 = vmatprep.subr.mxu0 0.0
    %683 = vmatpush1.msra.mxu0 0.0
    %684 = vmatprep.subr.mxu0 0.0
    %685 = vmatpush1.msra.mxu0 0.0
    %686 = vmatprep.subr.mxu0 0.0
    %687 = vmatpush1.msra.mxu0 0.0
    %688 = vmatprep.subr.mxu0 0.0
    %689 = vmatpush1.msra.mxu0 0.0
    %690 = vmatprep.subr.mxu0 0.0
    %691 = vmatpush1.msra.mxu0 0.0
    %692 = vmatprep.subr.mxu0 0.0
    %693 = vmatpush1.msra.mxu0 0.0
    %694 = vmatprep.subr.mxu0 0.0
    %695 = vmatpush1.msra.mxu0 0.0
    %696 = vmatprep.mubr.f32.mxu0 0.0
    %697 = vmatmul.mubr.f32.gmra.mrb[0].mxu0 %v630
    %v698 = vpop.f32.mrb[0].mxu0
    %v699 = vadd.f32 0.0, %v698
    %v700 = vpop.f32.mrb[0].mxu0
    %701 = vdwg.mxu0
    %v702 = vadd.f32 %v629, %v699
    %v703 = vxor.u32 %v702, 2147483648
    %v704 = vmul.f32 %v703, 1.442695
    %v705 = vpow.pop %v704
    %v706 = vadd.f32 %v705, 1.0
    %v707 = vrcp.pop %v706
    %v708 = vmul.f32 1.0, %v707
    %v709 = vtanh.pop %v702
    %v710 = vsel %vm204, %v709, %v708
    %v711 = vmul.f32 %v710, %v617
    %713 = vrot.lane.b32.xlu0 %v710, 64
    %v714 = vpop.permute.xlu0 %713
    %v716 = vmul.f32 %v710, %v714
    %718 = vrot.lane.b32.xlu0 %v716, 32
    %v719 = vpop.permute.xlu0 %718
    %v721 = vadd.f32 %v711, %v719
    %v722 = vtanh.pop %v721
    %724 = vrot.lane.b32.xlu0 %v722, 64
    %v725 = vpop.permute.xlu0 %724
    %v727 = vmul.f32 %v710, %v725
    %729 = vrot.lane.b32.xlu0 %v727, 32
    %v730 = vpop.permute.xlu0 %729
    %732 = vst.msk [vmem:[#allocation3 + $0x20] sm:$0xff] %vm208, %v730
    %v733 = vld [vmem:[#allocation2 + $0x28] sm:$0xff]
    %v734 = vsel %vm208, %v730, 0
    %736 = vmatprep.subr.mxu0 0.0
    %737 = vmatpush1.msra.mxu0 %v196
    %738 = vmatprep.subr.mxu0 0.0
    %739 = vmatpush1.msra.mxu0 %v197
    %740 = vmatprep.subr.mxu0 0.0
    %741 = vmatpush1.msra.mxu0 %v198
    %742 = vmatprep.subr.mxu0 0.0
    %743 = vmatpush1.msra.mxu0 %v199
    %744 = vmatprep.subr.mxu0 0.0
    %745 = vmatpush1.msra.mxu0 0.0
    %746 = vmatprep.subr.mxu0 0.0
    %747 = vmatpush1.msra.mxu0 0.0
    %748 = vmatprep.subr.mxu0 0.0
    %749 = vmatpush1.msra.mxu0 0.0
    %750 = vmatprep.subr.mxu0 0.0
    %751 = vmatpush1.msra.mxu0 0.0
    %752 = vmatprep.subr.mxu0 0.0
    %753 = vmatpush1.msra.mxu0 0.0
    %754 = vmatprep.subr.mxu0 0.0
    %755 = vmatpush1.msra.mxu0 0.0
    %756 = vmatprep.subr.mxu0 0.0
    %757 = vmatpush1.msra.mxu0 0.0
    %758 = vmatprep.subr.mxu0 0.0
    %759 = vmatpush1.msra.mxu0 0.0
    %760 = vmatprep.subr.mxu0 0.0
    %761 = vmatpush1.msra.mxu0 0.0
    %762 = vmatprep.subr.mxu0 0.0
    %763 = vmatpush1.msra.mxu0 0.0
    %764 = vmatprep.subr.mxu0 0.0
    %765 = vmatpush1.msra.mxu0 0.0
    %766 = vmatprep.subr.mxu0 0.0
    %767 = vmatpush1.msra.mxu0 0.0
    %768 = vmatprep.subr.mxu0 0.0
    %769 = vmatpush1.msra.mxu0 0.0
    %770 = vmatprep.subr.mxu0 0.0
    %771 = vmatpush1.msra.mxu0 0.0
    %772 = vmatprep.subr.mxu0 0.0
    %773 = vmatpush1.msra.mxu0 0.0
    %774 = vmatprep.subr.mxu0 0.0
    %775 = vmatpush1.msra.mxu0 0.0
    %776 = vmatprep.subr.mxu0 0.0
    %777 = vmatpush1.msra.mxu0 0.0
    %778 = vmatprep.subr.mxu0 0.0
    %779 = vmatpush1.msra.mxu0 0.0
    %780 = vmatprep.subr.mxu0 0.0
    %781 = vmatpush1.msra.mxu0 0.0
    %782 = vmatprep.subr.mxu0 0.0
    %783 = vmatpush1.msra.mxu0 0.0
    %784 = vmatprep.subr.mxu0 0.0
    %785 = vmatpush1.msra.mxu0 0.0
    %786 = vmatprep.subr.mxu0 0.0
    %787 = vmatpush1.msra.mxu0 0.0
    %788 = vmatprep.subr.mxu0 0.0
    %789 = vmatpush1.msra.mxu0 0.0
    %790 = vmatprep.subr.mxu0 0.0
    %791 = vmatpush1.msra.mxu0 0.0
    %792 = vmatprep.subr.mxu0 0.0
    %793 = vmatpush1.msra.mxu0 0.0
    %794 = vmatprep.subr.mxu0 0.0
    %795 = vmatpush1.msra.mxu0 0.0
    %796 = vmatprep.subr.mxu0 0.0
    %797 = vmatpush1.msra.mxu0 0.0
    %798 = vmatprep.subr.mxu0 0.0
    %799 = vmatpush1.msra.mxu0 0.0
    %800 = vmatprep.mubr.f32.mxu0 0.0
    %801 = vmatmul.mubr.f32.gmra.mrb[0].mxu0 %v734
    %v802 = vpop.f32.mrb[0].mxu0
    %v803 = vadd.f32 0.0, %v802
    %v804 = vpop.f32.mrb[0].mxu0
    %805 = vdwg.mxu0
    %v806 = vadd.f32 %v733, %v803
    %v807 = vxor.u32 %v806, 2147483648
    %v808 = vmul.f32 %v807, 1.442695
    %v809 = vpow.pop %v808
    %v810 = vadd.f32 %v809, 1.0
    %v811 = vrcp.pop %v810
    %v812 = vmul.f32 1.0, %v811
    %v813 = vtanh.pop %v806
    %v814 = vsel %vm204, %v813, %v812
    %v815 = vmul.f32 %v814, %v721
    %817 = vrot.lane.b32.xlu0 %v814, 64
    %v818 = vpop.permute.xlu0 %817
    %v820 = vmul.f32 %v814, %v818
    %822 = vrot.lane.b32.xlu0 %v820, 32
    %v823 = vpop.permute.xlu0 %822
    %v825 = vadd.f32 %v815, %v823
    %v826 = vtanh.pop %v825
    %828 = vrot.lane.b32.xlu0 %v826, 64
    %v829 = vpop.permute.xlu0 %828
    %v831 = vmul.f32 %v814, %v829
    %833 = vrot.lane.b32.xlu0 %v831, 32
    %v834 = vpop.permute.xlu0 %833
    %836 = vst.msk [vmem:[#allocation3 + $0x28] sm:$0xff] %vm208, %v834
    %v837 = vld [vmem:[#allocation2 + $0x30] sm:$0xff]
    %v838 = vsel %vm208, %v834, 0
    %840 = vmatprep.subr.mxu0 0.0
    %841 = vmatpush1.msra.mxu0 %v196
    %842 = vmatprep.subr.mxu0 0.0
    %843 = vmatpush1.msra.mxu0 %v197
    %844 = vmatprep.subr.mxu0 0.0
    %845 = vmatpush1.msra.mxu0 %v198
    %846 = vmatprep.subr.mxu0 0.0
    %847 = vmatpush1.msra.mxu0 %v199
    %848 = vmatprep.subr.mxu0 0.0
    %849 = vmatpush1.msra.mxu0 0.0
    %850 = vmatprep.subr.mxu0 0.0
    %851 = vmatpush1.msra.mxu0 0.0
    %852 = vmatprep.subr.mxu0 0.0
    %853 = vmatpush1.msra.mxu0 0.0
    %854 = vmatprep.subr.mxu0 0.0
    %855 = vmatpush1.msra.mxu0 0.0
    %856 = vmatprep.subr.mxu0 0.0
    %857 = vmatpush1.msra.mxu0 0.0
    %858 = vmatprep.subr.mxu0 0.0
    %859 = vmatpush1.msra.mxu0 0.0
    %860 = vmatprep.subr.mxu0 0.0
    %861 = vmatpush1.msra.mxu0 0.0
    %862 = vmatprep.subr.mxu0 0.0
    %863 = vmatpush1.msra.mxu0 0.0
    %864 = vmatprep.subr.mxu0 0.0
    %865 = vmatpush1.msra.mxu0 0.0
    %866 = vmatprep.subr.mxu0 0.0
    %867 = vmatpush1.msra.mxu0 0.0
    %868 = vmatprep.subr.mxu0 0.0
    %869 = vmatpush1.msra.mxu0 0.0
    %870 = vmatprep.subr.mxu0 0.0
    %871 = vmatpush1.msra.mxu0 0.0
    %872 = vmatprep.subr.mxu0 0.0
    %873 = vmatpush1.msra.mxu0 0.0
    %874 = vmatprep.subr.mxu0 0.0
    %875 = vmatpush1.msra.mxu0 0.0
    %876 = vmatprep.subr.mxu0 0.0
    %877 = vmatpush1.msra.mxu0 0.0
    %878 = vmatprep.subr.mxu0 0.0
    %879 = vmatpush1.msra.mxu0 0.0
    %880 = vmatprep.subr.mxu0 0.0
    %881 = vmatpush1.msra.mxu0 0.0
    %882 = vmatprep.subr.mxu0 0.0
    %883 = vmatpush1.msra.mxu0 0.0
    %884 = vmatprep.subr.mxu0 0.0
    %885 = vmatpush1.msra.mxu0 0.0
    %886 = vmatprep.subr.mxu0 0.0
    %887 = vmatpush1.msra.mxu0 0.0
    %888 = vmatprep.subr.mxu0 0.0
    %889 = vmatpush1.msra.mxu0 0.0
    %890 = vmatprep.subr.mxu0 0.0
    %891 = vmatpush1.msra.mxu0 0.0
    %892 = vmatprep.subr.mxu0 0.0
    %893 = vmatpush1.msra.mxu0 0.0
    %894 = vmatprep.subr.mxu0 0.0
    %895 = vmatpush1.msra.mxu0 0.0
    %896 = vmatprep.subr.mxu0 0.0
    %897 = vmatpush1.msra.mxu0 0.0
    %898 = vmatprep.subr.mxu0 0.0
    %899 = vmatpush1.msra.mxu0 0.0
    %900 = vmatprep.subr.mxu0 0.0
    %901 = vmatpush1.msra.mxu0 0.0
    %902 = vmatprep.subr.mxu0 0.0
    %903 = vmatpush1.msra.mxu0 0.0
    %904 = vmatprep.mubr.f32.mxu0 0.0
    %905 = vmatmul.mubr.f32.gmra.mrb[0].mxu0 %v838
    %v906 = vpop.f32.mrb[0].mxu0
    %v907 = vadd.f32 0.0, %v906
    %v908 = vpop.f32.mrb[0].mxu0
    %909 = vdwg.mxu0
    %v910 = vadd.f32 %v837, %v907
    %v911 = vxor.u32 %v910, 2147483648
    %v912 = vmul.f32 %v911, 1.442695
    %v913 = vpow.pop %v912
    %v914 = vadd.f32 %v913, 1.0
    %v915 = vrcp.pop %v914
    %v916 = vmul.f32 1.0, %v915
    %v917 = vtanh.pop %v910
    %v918 = vsel %vm204, %v917, %v916
    %v919 = vmul.f32 %v918, %v825
    %921 = vrot.lane.b32.xlu0 %v918, 64
    %v922 = vpop.permute.xlu0 %921
    %v924 = vmul.f32 %v918, %v922
    %926 = vrot.lane.b32.xlu0 %v924, 32
    %v927 = vpop.permute.xlu0 %926
    %v929 = vadd.f32 %v919, %v927
    %v930 = vtanh.pop %v929
    %932 = vrot.lane.b32.xlu0 %v930, 64
    %v933 = vpop.permute.xlu0 %932
    %v935 = vmul.f32 %v918, %v933
    %937 = vrot.lane.b32.xlu0 %v935, 32
    %v938 = vpop.permute.xlu0 %937
    %940 = vst.msk [vmem:[#allocation3 + $0x30] sm:$0xff] %vm208, %v938
    %v941 = vld [vmem:[#allocation2 + $0x38] sm:$0xff]
    %v942 = vsel %vm208, %v938, 0
    %944 = vmatprep.subr.mxu0 0.0
    %945 = vmatpush1.msra.mxu0 %v196
    %946 = vmatprep.subr.mxu0 0.0
    %947 = vmatpush1.msra.mxu0 %v197
    %948 = vmatprep.subr.mxu0 0.0
    %949 = vmatpush1.msra.mxu0 %v198
    %950 = vmatprep.subr.mxu0 0.0
    %951 = vmatpush1.msra.mxu0 %v199
    %952 = vmatprep.subr.mxu0 0.0
    %953 = vmatpush1.msra.mxu0 0.0
    %954 = vmatprep.subr.mxu0 0.0
    %955 = vmatpush1.msra.mxu0 0.0
    %956 = vmatprep.subr.mxu0 0.0
    %957 = vmatpush1.msra.mxu0 0.0
    %958 = vmatprep.subr.mxu0 0.0
    %959 = vmatpush1.msra.mxu0 0.0
    %960 = vmatprep.subr.mxu0 0.0
    %961 = vmatpush1.msra.mxu0 0.0
    %962 = vmatprep.subr.mxu0 0.0
    %963 = vmatpush1.msra.mxu0 0.0
    %964 = vmatprep.subr.mxu0 0.0
    %965 = vmatpush1.msra.mxu0 0.0
    %966 = vmatprep.subr.mxu0 0.0
    %967 = vmatpush1.msra.mxu0 0.0
    %968 = vmatprep.subr.mxu0 0.0
    %969 = vmatpush1.msra.mxu0 0.0
    %970 = vmatprep.subr.mxu0 0.0
    %971 = vmatpush1.msra.mxu0 0.0
    %972 = vmatprep.subr.mxu0 0.0
    %973 = vmatpush1.msra.mxu0 0.0
    %974 = vmatprep.subr.mxu0 0.0
    %975 = vmatpush1.msra.mxu0 0.0
    %976 = vmatprep.subr.mxu0 0.0
    %977 = vmatpush1.msra.mxu0 0.0
    %978 = vmatprep.subr.mxu0 0.0
    %979 = vmatpush1.msra.mxu0 0.0
    %980 = vmatprep.subr.mxu0 0.0
    %981 = vmatpush1.msra.mxu0 0.0
    %982 = vmatprep.subr.mxu0 0.0
    %983 = vmatpush1.msra.mxu0 0.0
    %984 = vmatprep.subr.mxu0 0.0
    %985 = vmatpush1.msra.mxu0 0.0
    %986 = vmatprep.subr.mxu0 0.0
    %987 = vmatpush1.msra.mxu0 0.0
    %988 = vmatprep.subr.mxu0 0.0
    %989 = vmatpush1.msra.mxu0 0.0
    %990 = vmatprep.subr.mxu0 0.0
    %991 = vmatpush1.msra.mxu0 0.0
    %992 = vmatprep.subr.mxu0 0.0
    %993 = vmatpush1.msra.mxu0 0.0
    %994 = vmatprep.subr.mxu0 0.0
    %995 = vmatpush1.msra.mxu0 0.0
    %996 = vmatprep.subr.mxu0 0.0
    %997 = vmatpush1.msra.mxu0 0.0
    %998 = vmatprep.subr.mxu0 0.0
    %999 = vmatpush1.msra.mxu0 0.0
    %1000 = vmatprep.subr.mxu0 0.0
    %1001 = vmatpush1.msra.mxu0 0.0
    %1002 = vmatprep.subr.mxu0 0.0
    %1003 = vmatpush1.msra.mxu0 0.0
    %1004 = vmatprep.subr.mxu0 0.0
    %1005 = vmatpush1.msra.mxu0 0.0
    %1006 = vmatprep.subr.mxu0 0.0
    %1007 = vmatpush1.msra.mxu0 0.0
    %1008 = vmatprep.mubr.f32.mxu0 0.0
    %1009 = vmatmul.mubr.f32.gmra.mrb[0].mxu0 %v942
    %v1010 = vpop.f32.mrb[0].mxu0
    %v1011 = vadd.f32 0.0, %v1010
    %v1012 = vpop.f32.mrb[0].mxu0
    %1013 = vdwg.mxu0
    %v1014 = vadd.f32 %v941, %v1011
    %v1015 = vxor.u32 %v1014, 2147483648
    %v1016 = vmul.f32 %v1015, 1.442695
    %v1017 = vpow.pop %v1016
    %v1018 = vadd.f32 %v1017, 1.0
    %v1019 = vrcp.pop %v1018
    %v1020 = vmul.f32 1.0, %v1019
    %v1021 = vtanh.pop %v1014
    %v1022 = vsel %vm204, %v1021, %v1020
    %v1023 = vmul.f32 %v1022, %v929
    %1025 = vrot.lane.b32.xlu0 %v1022, 64
    %v1026 = vpop.permute.xlu0 %1025
    %v1028 = vmul.f32 %v1022, %v1026
    %1030 = vrot.lane.b32.xlu0 %v1028, 32
    %v1031 = vpop.permute.xlu0 %1030
    %v1033 = vadd.f32 %v1023, %v1031
    %v1034 = vtanh.pop %v1033
    %1036 = vrot.lane.b32.xlu0 %v1034, 64
    %v1037 = vpop.permute.xlu0 %1036
    %v1039 = vmul.f32 %v1022, %v1037
    %1041 = vrot.lane.b32.xlu0 %v1039, 32
    %v1042 = vpop.permute.xlu0 %1041
    %1044 = vst.msk [vmem:[#allocation3 + $0x38] sm:$0xff] %vm208, %v1042
    %v1045 = vld [vmem:[#allocation3] sm:$0xff]
    %v1046 = vld [vmem:[#allocation3 + $0x8] sm:$0xff]
    %v1047 = vld [vmem:[#allocation3 + $0x10] sm:$0xff]
    %v1048 = vld [vmem:[#allocation3 + $0x18] sm:$0xff]
    %v1049 = vld [vmem:[#allocation3 + $0x20] sm:$0xff]
    %v1050 = vld [vmem:[#allocation3 + $0x28] sm:$0xff]
    %v1051 = vld [vmem:[#allocation3 + $0x30] sm:$0xff]
    %v1052 = vld [vmem:[#allocation3 + $0x38] sm:$0xff]
    %v1053 = vld [vmem:[%s6] sm:$0xff]
    %v1054 = vld [vmem:[%s6 + $0x8] sm:$0xff]
    %v1055 = vld [vmem:[%s6 + $0x10] sm:$0xff]
    %v1056 = vld [vmem:[%s6 + $0x18] sm:$0xff]
    %v1057 = vld [vmem:[%s7] sm:$0x1]
    %v1059 = vlaneseq
    %v1060 = vshrl.u32 %v1059, 7
    %v1061 = vsub.s32 0, %v1060
    %v1062 = vrot.slane %v1057, %v1061
    %v1065 = vsel %vm208, %v1045, 0
    %v1068 = vsel %vm208, %v1046, 0
    %v1071 = vsel %vm208, %v1047, 0
    %v1074 = vsel %vm208, %v1048, 0
    %v1077 = vsel %vm208, %v1049, 0
    %v1080 = vsel %vm208, %v1050, 0
    %v1083 = vsel %vm208, %v1051, 0
    %v1086 = vsel %vm208, %v1052, 0
    %1088 = vmatprep.subr.mxu0 0.0
    %1089 = vmatpush1.msra.mxu0 %v1053
    %1090 = vmatprep.subr.mxu0 0.0
    %1091 = vmatpush1.msra.mxu0 %v1054
    %1092 = vmatprep.subr.mxu0 0.0
    %1093 = vmatpush1.msra.mxu0 %v1055
    %1094 = vmatprep.subr.mxu0 0.0
    %1095 = vmatpush1.msra.mxu0 %v1056
    %1096 = vmatprep.subr.mxu0 0.0
    %1097 = vmatpush1.msra.mxu0 0.0
    %1098 = vmatprep.subr.mxu0 0.0
    %1099 = vmatpush1.msra.mxu0 0.0
    %1100 = vmatprep.subr.mxu0 0.0
    %1101 = vmatpush1.msra.mxu0 0.0
    %1102 = vmatprep.subr.mxu0 0.0
    %1103 = vmatpush1.msra.mxu0 0.0
    %1104 = vmatprep.subr.mxu0 0.0
    %1105 = vmatpush1.msra.mxu0 0.0
    %1106 = vmatprep.subr.mxu0 0.0
    %1107 = vmatpush1.msra.mxu0 0.0
    %1108 = vmatprep.subr.mxu0 0.0
    %1109 = vmatpush1.msra.mxu0 0.0
    %1110 = vmatprep.subr.mxu0 0.0
    %1111 = vmatpush1.msra.mxu0 0.0
    %1112 = vmatprep.subr.mxu0 0.0
    %1113 = vmatpush1.msra.mxu0 0.0
    %1114 = vmatprep.subr.mxu0 0.0
    %1115 = vmatpush1.msra.mxu0 0.0
    %1116 = vmatprep.subr.mxu0 0.0
    %1117 = vmatpush1.msra.mxu0 0.0
    %1118 = vmatprep.subr.mxu0 0.0
    %1119 = vmatpush1.msra.mxu0 0.0
    %1120 = vmatprep.subr.mxu0 0.0
    %1121 = vmatpush1.msra.mxu0 0.0
    %1122 = vmatprep.subr.mxu0 0.0
    %1123 = vmatpush1.msra.mxu0 0.0
    %1124 = vmatprep.subr.mxu0 0.0
    %1125 = vmatpush1.msra.mxu0 0.0
    %1126 = vmatprep.subr.mxu0 0.0
    %1127 = vmatpush1.msra.mxu0 0.0
    %1128 = vmatprep.subr.mxu0 0.0
    %1129 = vmatpush1.msra.mxu0 0.0
    %1130 = vmatprep.subr.mxu0 0.0
    %1131 = vmatpush1.msra.mxu0 0.0
    %1132 = vmatprep.subr.mxu0 0.0
    %1133 = vmatpush1.msra.mxu0 0.0
    %1134 = vmatprep.subr.mxu0 0.0
    %1135 = vmatpush1.msra.mxu0 0.0
    %1136 = vmatprep.subr.mxu0 0.0
    %1137 = vmatpush1.msra.mxu0 0.0
    %1138 = vmatprep.subr.mxu0 0.0
    %1139 = vmatpush1.msra.mxu0 0.0
    %1140 = vmatprep.subr.mxu0 0.0
    %1141 = vmatpush1.msra.mxu0 0.0
    %1142 = vmatprep.subr.mxu0 0.0
    %1143 = vmatpush1.msra.mxu0 0.0
    %1144 = vmatprep.subr.mxu0 0.0
    %1145 = vmatpush1.msra.mxu0 0.0
    %1146 = vmatprep.subr.mxu0 0.0
    %1147 = vmatpush1.msra.mxu0 0.0
    %1148 = vmatprep.subr.mxu0 0.0
    %1149 = vmatpush1.msra.mxu0 0.0
    %1150 = vmatprep.subr.mxu0 0.0
    %1151 = vmatpush1.msra.mxu0 0.0
    %1152 = vmatprep.mubr.f32.mxu0 0.0
    %1153 = vmatmul.mubr.f32.gmra.mrb[0].mxu0 %v1065
    %v1154 = vpop.f32.mrb[0].mxu0
    %v1155 = vadd.f32 %v1062, %v1154
    %v1156 = vpop.f32.mrb[0].mxu0
    %1157 = vmatprep.mubr.f32.mxu0 0.0
    %1158 = vmatmul.mubr.f32.gmra.mrb[0].mxu0 %v1068
    %v1159 = vpop.f32.mrb[0].mxu0
    %v1160 = vadd.f32 %v1062, %v1159
    %v1161 = vpop.f32.mrb[0].mxu0
    %1162 = vmatprep.mubr.f32.mxu0 0.0
    %1163 = vmatmul.mubr.f32.gmra.mrb[0].mxu0 %v1071
    %v1164 = vpop.f32.mrb[0].mxu0
    %v1165 = vadd.f32 %v1062, %v1164
    %v1166 = vpop.f32.mrb[0].mxu0
    %1167 = vmatprep.mubr.f32.mxu0 0.0
    %1168 = vmatmul.mubr.f32.gmra.mrb[0].mxu0 %v1074
    %v1169 = vpop.f32.mrb[0].mxu0
    %v1170 = vadd.f32 %v1062, %v1169
    %v1171 = vpop.f32.mrb[0].mxu0
    %1172 = vmatprep.mubr.f32.mxu0 0.0
    %1173 = vmatmul.mubr.f32.gmra.mrb[0].mxu0 %v1077
    %v1174 = vpop.f32.mrb[0].mxu0
    %v1175 = vadd.f32 %v1062, %v1174
    %v1176 = vpop.f32.mrb[0].mxu0
    %1177 = vmatprep.mubr.f32.mxu0 0.0
    %1178 = vmatmul.mubr.f32.gmra.mrb[0].mxu0 %v1080
    %v1179 = vpop.f32.mrb[0].mxu0
    %v1180 = vadd.f32 %v1062, %v1179
    %v1181 = vpop.f32.mrb[0].mxu0
    %1182 = vmatprep.mubr.f32.mxu0 0.0
    %1183 = vmatmul.mubr.f32.gmra.mrb[0].mxu0 %v1083
    %v1184 = vpop.f32.mrb[0].mxu0
    %v1185 = vadd.f32 %v1062, %v1184
    %v1186 = vpop.f32.mrb[0].mxu0
    %1187 = vmatprep.mubr.f32.mxu0 0.0
    %1188 = vmatmul.mubr.f32.gmra.mrb[0].mxu0 %v1086
    %v1189 = vpop.f32.mrb[0].mxu0
    %v1190 = vadd.f32 %v1062, %v1189
    %v1191 = vpop.f32.mrb[0].mxu0
    %1192 = vdwg.mxu0
    %v1193 = vxor.u32 %v1155, 2147483648
    %v1194 = vxor.u32 %v1160, 2147483648
    %v1195 = vxor.u32 %v1165, 2147483648
    %v1196 = vxor.u32 %v1170, 2147483648
    %v1197 = vxor.u32 %v1175, 2147483648
    %v1198 = vxor.u32 %v1180, 2147483648
    %v1199 = vxor.u32 %v1185, 2147483648
    %v1200 = vxor.u32 %v1190, 2147483648
    %v1201 = vmul.f32 %v1193, 1.442695
    %v1202 = vpow.pop %v1201
    %v1203 = vmul.f32 %v1194, 1.442695
    %v1204 = vpow.pop %v1203
    %v1205 = vmul.f32 %v1195, 1.442695
    %v1206 = vpow.pop %v1205
    %v1207 = vmul.f32 %v1196, 1.442695
    %v1208 = vpow.pop %v1207
    %v1209 = vmul.f32 %v1197, 1.442695
    %v1210 = vpow.pop %v1209
    %v1211 = vmul.f32 %v1198, 1.442695
    %v1212 = vpow.pop %v1211
    %v1213 = vmul.f32 %v1199, 1.442695
    %v1214 = vpow.pop %v1213
    %v1215 = vmul.f32 %v1200, 1.442695
    %v1216 = vpow.pop %v1215
    %v1217 = vadd.f32 %v1202, 1.0
    %v1218 = vadd.f32 %v1204, 1.0
    %v1219 = vadd.f32 %v1206, 1.0
    %v1220 = vadd.f32 %v1208, 1.0
    %v1221 = vadd.f32 %v1210, 1.0
    %v1222 = vadd.f32 %v1212, 1.0
    %v1223 = vadd.f32 %v1214, 1.0
    %v1224 = vadd.f32 %v1216, 1.0
    %v1225 = vrcp.pop %v1217
    %v1226 = vmul.f32 1.0, %v1225
    %v1227 = vrcp.pop %v1218
    %v1228 = vmul.f32 1.0, %v1227
    %v1229 = vrcp.pop %v1219
    %v1230 = vmul.f32 1.0, %v1229
    %v1231 = vrcp.pop %v1220
    %v1232 = vmul.f32 1.0, %v1231
    %v1233 = vrcp.pop %v1221
    %v1234 = vmul.f32 1.0, %v1233
    %v1235 = vrcp.pop %v1222
    %v1236 = vmul.f32 1.0, %v1235
    %v1237 = vrcp.pop %v1223
    %v1238 = vmul.f32 1.0, %v1237
    %v1239 = vrcp.pop %v1224
    %v1240 = vmul.f32 1.0, %v1239
    %1241 = vst [vmem:[#allocation7] sm:$0xff] %v1226
    %1242 = vst [vmem:[#allocation7 + $0x8] sm:$0xff] %v1228
    %1243 = vst [vmem:[#allocation7 + $0x10] sm:$0xff] %v1230
    %1244 = vst [vmem:[#allocation7 + $0x18] sm:$0xff] %v1232
    %1245 = vst [vmem:[#allocation7 + $0x20] sm:$0xff] %v1234
    %1246 = vst [vmem:[#allocation7 + $0x28] sm:$0xff] %v1236
    %1247 = vst [vmem:[#allocation7 + $0x30] sm:$0xff] %v1238
    %1248 = vst [vmem:[#allocation7 + $0x38] sm:$0xff] %v1240
    // Predicated region
    $region38: #{tpu_custom_call.1} parent=1 // pred_check
      _
    $region39: #{tpu_custom_call.1} parent=1 // pred_check_branch
      %1250 = sbr.rel (0) target = $region41
    $region40: #{tpu_custom_call.1} parent=1 // pred_region
      %s1252 = ssub.s32 1024, 1024
      %1253 = vsyncadd [#allocation6], %s1252
      %s1254 = sshll.u32 [#allocation7], 4
      %s1255 = int_to_ptr.vmem [resolvable:$true] %s1254
      %1260 = dma.vmem_to_hbm [thread:$0]  %s1255, 1024, %s8, [#allocation6], 128, 128, 8
    $region41: #{tpu_custom_call.1} parent=1 // pred_fallthru
      _
    // Predicated region
    $region42: #{tpu_custom_call.1} parent=1 // pred_check
      _
    $region43: #{tpu_custom_call.1} parent=1 // pred_check_branch
      %1262 = sbr.rel (0) target = $region45
    $region44: #{tpu_custom_call.1} parent=1 // pred_region
      %1263 = dma.done [#allocation6], 1024
    $region45: #{tpu_custom_call.1} parent=1 // pred_fallthru
      _
    %1264 = vsyncpa [#allocation5], 1
    %1265 = vsyncpa [#allocation6], 1

</llo_original>
